<compile_context>
chip_gen: v7x
topology: tpu7x:2x2x1
jax: 0.10.0
libtpu: 0.0.40
codegen_flags: <defaults>
</compile_context>

<pallas_src>
import jax
import jax.numpy as jnp
from jax import lax
from jax.experimental import pallas as pl
from jax.experimental.pallas import tpu as pltpu

INPUT_DIM = 135
HIDDEN = 512
NUM_JOINTS = 14
ROT_DIM = NUM_JOINTS * 4    # 56
HEAD_PAD = 128              # fused head width: [0:56]=rot, [56:59]=trans, rest 0
NORM_EPS = 1e-12            # F.normalize default eps
MAX_TM = 1024               # max batch-tile rows per grid step (multiple of 8)


def _round_up(n, m):
    return ((n + m - 1) // m) * m


def _num_tensorcores():
    """2 TensorCores per chip on v4 / v7x (megacore), 1 on v5e / v6e."""
    try:
        kind = jax.devices()[0].device_kind.lower()
    except Exception:
        return 1
    if "v4" in kind or "v7" in kind or "7x" in kind:
        return 2
    return 1


def _choose_tm(batch, num_cores):
    """Evenly split B across grid steps: caps padding at <8 rows/step, keeps
    tm <= MAX_TM (multiple of 8), and guarantees >= num_cores steps when B is
    large enough so both TensorCores get work on v7x."""
    min_steps = num_cores if batch >= 8 * num_cores else 1
    steps = max(min_steps, pl.cdiv(batch, MAX_TM))
    return _round_up(pl.cdiv(batch, steps), 8)


def retarget_kernel(x_ref, w1_ref, b1_ref, w2_ref, b2_ref,
                    wh_ref, bh_ref, g_ref, base_ref, out_ref):
    # shared MLP: Linear -> ReLU -> Linear -> ReLU (bf16 MXU operands, f32 accum)
    x = x_ref[...].astype(jnp.bfloat16)                     # in-kernel cast (VPU)
    h = jnp.dot(x, w1_ref[...], preferred_element_type=jnp.float32)
    h = jnp.maximum(h + b1_ref[...], 0.0).astype(jnp.bfloat16)
    h = jnp.dot(h, w2_ref[...], preferred_element_type=jnp.float32)
    h = jnp.maximum(h + b2_ref[...], 0.0).astype(jnp.bfloat16)

    # fused heads: single lane-dense (TM, 128) result
    y = jnp.dot(h, wh_ref[...], preferred_element_type=jnp.float32) + bh_ref[...]

    # Per-quaternion sum of squares via block-diagonal grouping matrix G
    # (precomputed bf16, VMEM-resident; f32 accumulation on the MXU). `base` is
    # 1.0 on non-rot columns so their scale is exactly 1 (trans / zero-pad pass
    # through untouched).
    sq = jnp.dot((y * y).astype(jnp.bfloat16), g_ref[...],
                 preferred_element_type=jnp.float32) + base_ref[...]
    # F.normalize: x / max(||x||, eps)  ==  x * rsqrt(max(||x||^2, eps^2))
    scale = lax.rsqrt(jnp.maximum(sq, NORM_EPS * NORM_EPS))
    out_ref[...] = (y * scale).astype(out_ref.dtype)


def retarget_forward(x, prepared):
    """x: (B, INPUT_DIM) f32. Returns (pred_trans (B, 3), pred_rot (B, 14, 4))."""
    w1, b1, w2, b2, wh, bh, g, base = prepared
    B = x.shape[0]

    tm = _choose_tm(B, _num_tensorcores())
    grid = pl.cdiv(B, tm)

    fixed = lambda shape: pl.BlockSpec(shape, lambda i: (0, 0))

    out = pl.pallas_call(
        retarget_kernel,
        out_shape=jax.ShapeDtypeStruct((B, HEAD_PAD), jnp.float32),
        grid=(grid,),
        in_specs=[
            pl.BlockSpec((tm, INPUT_DIM), lambda i: (i, 0)),  # x tile (f32, unpadded K)
            fixed((INPUT_DIM, HIDDEN)),                       # W1 (bf16)
            fixed((1, HIDDEN)),                               # b1 (f32)
            fixed((HIDDEN, HIDDEN)),                          # W2 (bf16)
            fixed((1, HIDDEN)),                               # b2 (f32)
            fixed((HIDDEN, HEAD_PAD)),                        # fused head W (bf16)
            fixed((1, HEAD_PAD)),                             # fused head b (f32)
            fixed((HEAD_PAD, HEAD_PAD)),                      # grouping matrix G (bf16)
            fixed((1, HEAD_PAD)),                             # base mask (f32)
        ],
        out_specs=pl.BlockSpec((tm, HEAD_PAD), lambda i: (i, 0)),
        compiler_params=pltpu.CompilerParams(
            dimension_semantics=("parallel",),
            vmem_limit_bytes=32 * 1024 * 1024),
    )(x.astype(jnp.float32), w1, b1, w2, b2, wh, bh, g, base)

    pred_rot = out[:, :ROT_DIM].reshape(B, NUM_JOINTS, 4)
    pred_trans = out[:, ROT_DIM:ROT_DIM + 3]
    return pred_trans, pred_rot


retarget_forward_jit = jax.jit(retarget_forward)


def init_params(key):
    """nn.Linear-like init (uniform +/- 1/sqrt(fan_in)); weights stored (in, out)."""
    def linear(key, fan_in, fan_out):
        kw, kb = jax.random.split(key)
        bound = 1.0 / jnp.sqrt(jnp.float32(fan_in))
        w = jax.random.uniform(kw, (fan_in, fan_out), jnp.float32, -bound, bound)
        b = jax.random.uniform(kb, (1, fan_out), jnp.float32, -bound, bound)
        return w, b

    k1, k2, k3, k4 = jax.random.split(key, 4)
    w1, b1 = linear(k1, INPUT_DIM, HIDDEN)
    w2, b2 = linear(k2, HIDDEN, HIDDEN)
    wt, bt = linear(k3, HIDDEN, 3)
    wr, br = linear(k4, HIDDEN, ROT_DIM)
    return (w1, b1, w2, b2, wt, bt, wr, br)


def prepare_params(params):
    """One-time: fuse heads, build G/base, cast MXU operands to bf16."""
    w1, b1, w2, b2, wt, bt, wr, br = params

    wh = jnp.zeros((HIDDEN, HEAD_PAD), jnp.float32)
    wh = wh.at[:, :ROT_DIM].set(wr).at[:, ROT_DIM:ROT_DIM + 3].set(wt)
    bh = jnp.zeros((1, HEAD_PAD), jnp.float32)
    bh = bh.at[:, :ROT_DIM].set(br).at[:, ROT_DIM:ROT_DIM + 3].set(bt)

    # Layout-coupled to HEAD_PAD column assignment above ([0:56]=rot, [56:59]=trans).
    idx = jnp.arange(HEAD_PAD)
    is_rot = idx < ROT_DIM
    same_grp = (idx[:, None] // 4) == (idx[None, :] // 4)
    g = (is_rot[:, None] & is_rot[None, :] & same_grp).astype(jnp.bfloat16)
    base = (~is_rot).astype(jnp.float32)[None, :]

    return (w1.astype(jnp.bfloat16), b1,
            w2.astype(jnp.bfloat16), b2,
            wh.astype(jnp.bfloat16), bh, g, base)


def reference_forward(x, params):
    """Pure-JAX f32 reference matching the PyTorch module semantics."""
    w1, b1, w2, b2, wt, bt, wr, br = params
    h = jnp.maximum(x @ w1 + b1, 0.0)
    h = jnp.maximum(h @ w2 + b2, 0.0)
    trans = h @ wt + bt
    rot = (h @ wr + br).reshape(-1, NUM_JOINTS, 4)
    norm = jnp.sqrt(jnp.sum(rot * rot, axis=-1, keepdims=True))
    rot = rot / jnp.maximum(norm, NORM_EPS)
    return trans, rot


if __name__ == "__main__":
    key = jax.random.PRNGKey(0)
    kx, kp = jax.random.split(key)

    B = 8
    x = jax.random.normal(kx, (B, INPUT_DIM), jnp.float32)
    params = init_params(kp)
    prepared = prepare_params(params)

    pred_trans, pred_rot = retarget_forward_jit(x, prepared)
    jax.block_until_ready((pred_trans, pred_rot))

    ref_trans, ref_rot = reference_forward(x, params)
    assert pred_trans.shape == (B, 3)
    assert pred_rot.shape == (B, NUM_JOINTS, 4)
    # Tolerance loosened (vs. f32 reference) to account for bf16 MXU operands.
    assert jnp.allclose(pred_trans, ref_trans, atol=5e-2, rtol=5e-2)
    assert jnp.allclose(pred_rot, ref_rot, atol=5e-2, rtol=5e-2)

    print("KERNEL_OK")
</pallas_src>

<mosaic_0001>
module attributes {stable_mosaic.version = 11 : i64} {
  func.func @retarget_kernel(%arg0: i32, %arg1: memref<8x135xf32, #tpu.memory_space<vmem>>, %arg2: memref<135x512xbf16, #tpu.memory_space<vmem>>, %arg3: memref<1x512xf32, #tpu.memory_space<vmem>>, %arg4: memref<512x512xbf16, #tpu.memory_space<vmem>>, %arg5: memref<1x512xf32, #tpu.memory_space<vmem>>, %arg6: memref<512x128xbf16, #tpu.memory_space<vmem>>, %arg7: memref<1x128xf32, #tpu.memory_space<vmem>>, %arg8: memref<128x128xbf16, #tpu.memory_space<vmem>>, %arg9: memref<1x128xf32, #tpu.memory_space<vmem>>, %arg10: memref<8x128xf32, #tpu.memory_space<vmem>>) attributes {dimension_semantics = [#tpu.dimension_semantics<parallel>], iteration_bounds = array<i64: 1>, scalar_prefetch = 0 : i64, scratch_operands = 0 : i64, tpu.core_type = #tpu.core_type<tc>, window_params = [{transform_indices = @transform_0, window_bounds = array<i64: 8, 135>}, {pipeline_mode = #tpu.pipeline_mode<synchronous>, transform_indices = @transform_1, window_bounds = array<i64: 135, 512>}, {pipeline_mode = #tpu.pipeline_mode<synchronous>, transform_indices = @transform_2, window_bounds = array<i64: 1, 512>}, {pipeline_mode = #tpu.pipeline_mode<synchronous>, transform_indices = @transform_3, window_bounds = array<i64: 512, 512>}, {pipeline_mode = #tpu.pipeline_mode<synchronous>, transform_indices = @transform_4, window_bounds = array<i64: 1, 512>}, {pipeline_mode = #tpu.pipeline_mode<synchronous>, transform_indices = @transform_5, window_bounds = array<i64: 512, 128>}, {pipeline_mode = #tpu.pipeline_mode<synchronous>, transform_indices = @transform_6, window_bounds = array<i64: 1, 128>}, {pipeline_mode = #tpu.pipeline_mode<synchronous>, transform_indices = @transform_7, window_bounds = array<i64: 128, 128>}, {pipeline_mode = #tpu.pipeline_mode<synchronous>, transform_indices = @transform_8, window_bounds = array<i64: 1, 128>}, {transform_indices = @transform_9, window_bounds = array<i64: 8, 128>}]} {
    %c0 = arith.constant 0 : index
    %c0_0 = arith.constant 0 : index
    %0 = vector.load %arg1[%c0, %c0_0] : memref<8x135xf32, #tpu.memory_space<vmem>>, vector<8x135xf32>
    %1 = arith.truncf %0 : vector<8x135xf32> to vector<8x135xbf16>
    %c0_1 = arith.constant 0 : index
    %c0_2 = arith.constant 0 : index
    %2 = vector.load %arg2[%c0_1, %c0_2] : memref<135x512xbf16, #tpu.memory_space<vmem>>, vector<135x512xbf16>
    %cst = arith.constant dense<0.000000e+00> : vector<8x512xf32>
    %3 = tpu.matmul %1, %2, %cst {dimension_numbers = #tpu.dot_dimension_numbers<[1], [0], [0], [1], [0, 0, 1, 1], [], []>} : vector<8x135xbf16>, vector<135x512xbf16>, vector<8x512xf32> -> vector<8x512xf32>
    %c0_3 = arith.constant 0 : index
    %c0_4 = arith.constant 0 : index
    %4 = vector.load %arg3[%c0_3, %c0_4] : memref<1x512xf32, #tpu.memory_space<vmem>>, vector<1x512xf32>
    %5 = vector.broadcast %4 : vector<1x512xf32> to vector<8x512xf32>
    %6 = arith.addf %3, %5 : vector<8x512xf32>
    %cst_5 = arith.constant 0.000000e+00 : f32
    %7 = vector.broadcast %cst_5 : f32 to vector<8x512xf32>
    %8 = arith.maximumf %6, %7 : vector<8x512xf32>
    %9 = arith.truncf %8 : vector<8x512xf32> to vector<8x512xbf16>
    %c0_6 = arith.constant 0 : index
    %c0_7 = arith.constant 0 : index
    %10 = vector.load %arg4[%c0_6, %c0_7] : memref<512x512xbf16, #tpu.memory_space<vmem>>, vector<512x512xbf16>
    %cst_8 = arith.constant dense<0.000000e+00> : vector<8x512xf32>
    %11 = tpu.matmul %9, %10, %cst_8 {dimension_numbers = #tpu.dot_dimension_numbers<[1], [0], [0], [1], [0, 0, 1, 1], [], []>} : vector<8x512xbf16>, vector<512x512xbf16>, vector<8x512xf32> -> vector<8x512xf32>
    %c0_9 = arith.constant 0 : index
    %c0_10 = arith.constant 0 : index
    %12 = vector.load %arg5[%c0_9, %c0_10] : memref<1x512xf32, #tpu.memory_space<vmem>>, vector<1x512xf32>
    %13 = vector.broadcast %12 : vector<1x512xf32> to vector<8x512xf32>
    %14 = arith.addf %11, %13 : vector<8x512xf32>
    %cst_11 = arith.constant 0.000000e+00 : f32
    %15 = vector.broadcast %cst_11 : f32 to vector<8x512xf32>
    %16 = arith.maximumf %14, %15 : vector<8x512xf32>
    %17 = arith.truncf %16 : vector<8x512xf32> to vector<8x512xbf16>
    %c0_12 = arith.constant 0 : index
    %c0_13 = arith.constant 0 : index
    %18 = vector.load %arg6[%c0_12, %c0_13] : memref<512x128xbf16, #tpu.memory_space<vmem>>, vector<512x128xbf16>
    %cst_14 = arith.constant dense<0.000000e+00> : vector<8x128xf32>
    %19 = tpu.matmul %17, %18, %cst_14 {dimension_numbers = #tpu.dot_dimension_numbers<[1], [0], [0], [1], [0, 0, 1, 1], [], []>} : vector<8x512xbf16>, vector<512x128xbf16>, vector<8x128xf32> -> vector<8x128xf32>
    %c0_15 = arith.constant 0 : index
    %c0_16 = arith.constant 0 : index
    %20 = vector.load %arg7[%c0_15, %c0_16] : memref<1x128xf32, #tpu.memory_space<vmem>>, vector<1x128xf32>
    %21 = vector.broadcast %20 : vector<1x128xf32> to vector<8x128xf32>
    %22 = arith.addf %19, %21 : vector<8x128xf32>
    %23 = arith.mulf %22, %22 : vector<8x128xf32>
    %24 = arith.truncf %23 : vector<8x128xf32> to vector<8x128xbf16>
    %c0_17 = arith.constant 0 : index
    %c0_18 = arith.constant 0 : index
    %25 = vector.load %arg8[%c0_17, %c0_18] : memref<128x128xbf16, #tpu.memory_space<vmem>>, vector<128x128xbf16>
    %cst_19 = arith.constant dense<0.000000e+00> : vector<8x128xf32>
    %26 = tpu.matmul %24, %25, %cst_19 {dimension_numbers = #tpu.dot_dimension_numbers<[1], [0], [0], [1], [0, 0, 1, 1], [], []>} : vector<8x128xbf16>, vector<128x128xbf16>, vector<8x128xf32> -> vector<8x128xf32>
    %c0_20 = arith.constant 0 : index
    %c0_21 = arith.constant 0 : index
    %27 = vector.load %arg9[%c0_20, %c0_21] : memref<1x128xf32, #tpu.memory_space<vmem>>, vector<1x128xf32>
    %28 = vector.broadcast %27 : vector<1x128xf32> to vector<8x128xf32>
    %29 = arith.addf %26, %28 : vector<8x128xf32>
    %cst_22 = arith.constant 1.000000e-24 : f32
    %30 = vector.broadcast %cst_22 : f32 to vector<8x128xf32>
    %31 = arith.maximumf %29, %30 : vector<8x128xf32>
    %32 = math.rsqrt %31 : vector<8x128xf32>
    %33 = arith.mulf %22, %32 : vector<8x128xf32>
    %c0_23 = arith.constant 0 : index
    %c0_24 = arith.constant 0 : index
    %34 = vector.load %arg10[%c0_23, %c0_24] : memref<8x128xf32, #tpu.memory_space<vmem>>, vector<8x128xf32>
    tpu.vector_store %arg10[%c0_23, %c0_24], %33 {strides = array<i32>} : memref<8x128xf32, #tpu.memory_space<vmem>>, vector<8x128xf32>,
    return
  }
  func.func @transform_0(%arg0: i32) -> (i32, i32) {
    %c0_i32 = arith.constant 0 : i32
    %c0_i32_0 = arith.constant 0 : i32
    return %arg0, %c0_i32 : i32, i32
  }
  func.func @transform_1(%arg0: i32) -> (i32, i32) {
    %c0_i32 = arith.constant 0 : i32
    %c0_i32_0 = arith.constant 0 : i32
    %c0_i32_1 = arith.constant 0 : i32
    return %c0_i32, %c0_i32_0 : i32, i32
  }
  func.func @transform_2(%arg0: i32) -> (i32, i32) {
    %c0_i32 = arith.constant 0 : i32
    %c0_i32_0 = arith.constant 0 : i32
    %c0_i32_1 = arith.constant 0 : i32
    return %c0_i32, %c0_i32_0 : i32, i32
  }
  func.func @transform_3(%arg0: i32) -> (i32, i32) {
    %c0_i32 = arith.constant 0 : i32
    %c0_i32_0 = arith.constant 0 : i32
    %c0_i32_1 = arith.constant 0 : i32
    return %c0_i32, %c0_i32_0 : i32, i32
  }
  func.func @transform_4(%arg0: i32) -> (i32, i32) {
    %c0_i32 = arith.constant 0 : i32
    %c0_i32_0 = arith.constant 0 : i32
    %c0_i32_1 = arith.constant 0 : i32
    return %c0_i32, %c0_i32_0 : i32, i32
  }
  func.func @transform_5(%arg0: i32) -> (i32, i32) {
    %c0_i32 = arith.constant 0 : i32
    %c0_i32_0 = arith.constant 0 : i32
    %c0_i32_1 = arith.constant 0 : i32
    return %c0_i32, %c0_i32_0 : i32, i32
  }
  func.func @transform_6(%arg0: i32) -> (i32, i32) {
    %c0_i32 = arith.constant 0 : i32
    %c0_i32_0 = arith.constant 0 : i32
    %c0_i32_1 = arith.constant 0 : i32
    return %c0_i32, %c0_i32_0 : i32, i32
  }
  func.func @transform_7(%arg0: i32) -> (i32, i32) {
    %c0_i32 = arith.constant 0 : i32
    %c0_i32_0 = arith.constant 0 : i32
    %c0_i32_1 = arith.constant 0 : i32
    return %c0_i32, %c0_i32_0 : i32, i32
  }
  func.func @transform_8(%arg0: i32) -> (i32, i32) {
    %c0_i32 = arith.constant 0 : i32
    %c0_i32_0 = arith.constant 0 : i32
    %c0_i32_1 = arith.constant 0 : i32
    return %c0_i32, %c0_i32_0 : i32, i32
  }
  func.func @transform_9(%arg0: i32) -> (i32, i32) {
    %c0_i32 = arith.constant 0 : i32
    %c0_i32_0 = arith.constant 0 : i32
    return %arg0, %c0_i32 : i32, i32
  }
}

</mosaic_0001>

<llo_original>
// kernel: retarget_forward.1
$region0: #{retarget_forward.1}
  #allocation0 [shape = 'u32[]', space=smem, size = 0x4, offset = 0x4, fixed_abs, tag = 'smem constant byte address 0x4 - core index']
  #allocation1 [shape = 'u32[144,128]{1,0:T(1,128)}', space=vmem, size = 0x12000, scoped, tag = 'internal scratch']
  %s0 = inlined_call_operand.hbm [shape: f32[8,135], index: 0, kind: input, shape index: {}]
  %s1 = inlined_call_operand.hbm [shape: bf16[135,512], index: 1, kind: input, shape index: {}]
  %s2 = inlined_call_operand.vmem [shape: f32[1,512], index: 2, kind: input, shape index: {}]
  %s3 = inlined_call_operand.hbm [shape: bf16[512,512], index: 3, kind: input, shape index: {}]
  %s4 = inlined_call_operand.vmem [shape: f32[1,512], index: 4, kind: input, shape index: {}]
  %s5 = inlined_call_operand.hbm [shape: bf16[512,128], index: 5, kind: input, shape index: {}]
  %s6 = inlined_call_operand.vmem [shape: f32[1,128], index: 6, kind: input, shape index: {}]
  %s7 = inlined_call_operand.hbm [shape: bf16[128,128], index: 7, kind: input, shape index: {}]
  %s8 = inlined_call_operand.vmem [shape: f32[1,128], index: 8, kind: input, shape index: {}]
  %s9 = inlined_call_operand.vmem [shape: f32[8,128], index: 9, kind: output, shape index: {}]
  %s10 = sld [smem:[#allocation0]]
  $region66: #{retarget_forward.1} parent=0
    _
  %s12 = ssub.s32 1, %s10
  %s13 = scalar_select 0, %s12, %s10
  $region1: #{retarget_forward.1} parent=0
    #allocation2 [shape = 'u8[8192]{0}', space=vmem, size = 0x2000, scoped, tag = 'input window, operand 0, single buffered']
    #allocation3 [shape = 's32[1]{0}', space=sflag, size = 0x4, scoped, tag = 'scoped memory for retarget_forward.1']
    #allocation4 [shape = 'u8[139264]{0}', space=vmem, size = 0x22000, scoped, tag = 'input window, operand 1, single buffered']
    #allocation5 [shape = 's32[1]{0}', space=sflag, size = 0x4, scoped, tag = 'scoped memory for retarget_forward.1']
    #allocation6 [shape = 'u8[524288]{0}', space=vmem, size = 0x80000, scoped, tag = 'input window, operand 3, single buffered']
    #allocation7 [shape = 'u8[131072]{0}', space=vmem, size = 0x20000, scoped, tag = 'input window, operand 5, single buffered']
    #allocation8 [shape = 's32[1]{0}', space=sflag, size = 0x4, scoped, tag = 'scoped memory for retarget_forward.1']
    #allocation9 [shape = 'u8[32768]{0}', space=vmem, size = 0x8000, scoped, tag = 'input window, operand 7, single buffered']
    %14 = vsyncpa [#allocation3], 0
    %15 = vsyncpa [#allocation5], 0
    %16 = vsyncpa [#allocation8], 0
    // Predicated region
    $region2: #{retarget_forward.1} parent=1 // pred_check
      _
    $region3: #{retarget_forward.1} parent=1 // pred_check_branch
      %18 = sbr.rel (0) target = $region5
    $region4: #{retarget_forward.1} parent=1 // pred_region
      %s20 = ssub.s32 256, 256
      %21 = vsyncadd [#allocation3], %s20
      %s23 = sshll.u32 [#allocation2], 4
      %s24 = int_to_ptr.vmem [resolvable:$true] %s23
      %26 = dma.hbm_to_vmem [thread:$0]  %s0, 256, %s24, [#allocation3]
    $region5: #{retarget_forward.1} parent=1 // pred_fallthru
      _
    // Predicated region
    $region6: #{retarget_forward.1} parent=1 // pred_check
      _
    $region7: #{retarget_forward.1} parent=1 // pred_check_branch
      %28 = sbr.rel (0) target = $region9
    $region8: #{retarget_forward.1} parent=1 // pred_region
      %s30 = ssub.s32 4352, 4352
      %31 = vsyncadd [#allocation5], %s30
      %s32 = sshll.u32 [#allocation4], 4
      %s33 = int_to_ptr.vmem [resolvable:$true] %s32
      %38 = dma.hbm_to_vmem [thread:$0]  %s1, 4352, %s33, [#allocation5], 256, 256, 16
    $region9: #{retarget_forward.1} parent=1 // pred_fallthru
      _
    // Predicated region
    $region10: #{retarget_forward.1} parent=1 // pred_check
      _
    $region11: #{retarget_forward.1} parent=1 // pred_check_branch
      %40 = sbr.rel (0) target = $region13
    $region12: #{retarget_forward.1} parent=1 // pred_region
      _
    $region13: #{retarget_forward.1} parent=1 // pred_fallthru
      _
    // Predicated region
    $region14: #{retarget_forward.1} parent=1 // pred_check
      _
    $region15: #{retarget_forward.1} parent=1 // pred_check_branch
      %42 = sbr.rel (0) target = $region17
    $region16: #{retarget_forward.1} parent=1 // pred_region
      %s44 = ssub.s32 16384, 16384
      %45 = vsyncadd [#allocation5], %s44
      %s46 = sshll.u32 [#allocation6], 4
      %s47 = int_to_ptr.vmem [resolvable:$true] %s46
      %52 = dma.hbm_to_vmem [thread:$0]  %s3, 16384, %s47, [#allocation5], 256, 256, 16
    $region17: #{retarget_forward.1} parent=1 // pred_fallthru
      _
    // Predicated region
    $region18: #{retarget_forward.1} parent=1 // pred_check
      _
    $region19: #{retarget_forward.1} parent=1 // pred_check_branch
      %54 = sbr.rel (0) target = $region21
    $region20: #{retarget_forward.1} parent=1 // pred_region
      _
    $region21: #{retarget_forward.1} parent=1 // pred_fallthru
      _
    // Predicated region
    $region22: #{retarget_forward.1} parent=1 // pred_check
      _
    $region23: #{retarget_forward.1} parent=1 // pred_check_branch
      %56 = sbr.rel (0) target = $region25
    $region24: #{retarget_forward.1} parent=1 // pred_region
      %s58 = ssub.s32 4096, 4096
      %59 = vsyncadd [#allocation8], %s58
      %s60 = sshll.u32 [#allocation7], 4
      %s61 = int_to_ptr.vmem [resolvable:$true] %s60
      %66 = dma.hbm_to_vmem [thread:$0]  %s5, 4096, %s61, [#allocation8], 64, 64, 4
    $region25: #{retarget_forward.1} parent=1 // pred_fallthru
      _
    // Predicated region
    $region26: #{retarget_forward.1} parent=1 // pred_check
      _
    $region27: #{retarget_forward.1} parent=1 // pred_check_branch
      %68 = sbr.rel (0) target = $region29
    $region28: #{retarget_forward.1} parent=1 // pred_region
      _
    $region29: #{retarget_forward.1} parent=1 // pred_fallthru
      _
    // Predicated region
    $region30: #{retarget_forward.1} parent=1 // pred_check
      _
    $region31: #{retarget_forward.1} parent=1 // pred_check_branch
      %70 = sbr.rel (0) target = $region33
    $region32: #{retarget_forward.1} parent=1 // pred_region
      %s72 = ssub.s32 1024, 1024
      %73 = vsyncadd [#allocation8], %s72
      %s74 = sshll.u32 [#allocation9], 4
      %s75 = int_to_ptr.vmem [resolvable:$true] %s74
      %80 = dma.hbm_to_vmem [thread:$0]  %s7, 1024, %s75, [#allocation8], 64, 64, 4
    $region33: #{retarget_forward.1} parent=1 // pred_fallthru
      _
    // Predicated region
    $region34: #{retarget_forward.1} parent=1 // pred_check
      _
    $region35: #{retarget_forward.1} parent=1 // pred_check_branch
      %82 = sbr.rel (0) target = $region37
    $region36: #{retarget_forward.1} parent=1 // pred_region
      _
    $region37: #{retarget_forward.1} parent=1 // pred_fallthru
      _
    // Predicated region
    $region38: #{retarget_forward.1} parent=1 // pred_check
      _
    $region39: #{retarget_forward.1} parent=1 // pred_check_branch
      %84 = sbr.rel (0) target = $region41
    $region40: #{retarget_forward.1} parent=1 // pred_region
      %85 = dma.done [#allocation3], 256
    $region41: #{retarget_forward.1} parent=1 // pred_fallthru
      _
    // Predicated region
    $region42: #{retarget_forward.1} parent=1 // pred_check
      _
    $region43: #{retarget_forward.1} parent=1 // pred_check_branch
      %87 = sbr.rel (0) target = $region45
    $region44: #{retarget_forward.1} parent=1 // pred_region
      %88 = dma.done [#allocation5], 4352
    $region45: #{retarget_forward.1} parent=1 // pred_fallthru
      _
    // Predicated region
    $region46: #{retarget_forward.1} parent=1 // pred_check
      _
    $region47: #{retarget_forward.1} parent=1 // pred_check_branch
      %90 = sbr.rel (0) target = $region49
    $region48: #{retarget_forward.1} parent=1 // pred_region
      %91 = dma.done [#allocation5], 16384
    $region49: #{retarget_forward.1} parent=1 // pred_fallthru
      _
    // Predicated region
    $region50: #{retarget_forward.1} parent=1 // pred_check
      _
    $region51: #{retarget_forward.1} parent=1 // pred_check_branch
      %93 = sbr.rel (0) target = $region53
    $region52: #{retarget_forward.1} parent=1 // pred_region
      %94 = dma.done [#allocation8], 4096
    $region53: #{retarget_forward.1} parent=1 // pred_fallthru
      _
    // Predicated region
    $region54: #{retarget_forward.1} parent=1 // pred_check
      _
    $region55: #{retarget_forward.1} parent=1 // pred_check_branch
      %96 = sbr.rel (0) target = $region57
    $region56: #{retarget_forward.1} parent=1 // pred_region
      %97 = dma.done [#allocation8], 1024
    $region57: #{retarget_forward.1} parent=1 // pred_fallthru
      _
    %v99 = vld [vmem:[#allocation2] sm:$0xff]
    %v100 = vld [vmem:[#allocation2 + $0x8] sm:$0xff]
    %v101 = vpack.c.bf16 %v99, %v99
    %v102 = vpack.c.bf16 %v100, %v100
    %v103 = vld [vmem:[#allocation4] sm:$0xff]
    %v104 = vld [vmem:[#allocation4 + $0x8] sm:$0xff]
    %v105 = vld [vmem:[#allocation4 + $0x10] sm:$0xff]
    %v106 = vld [vmem:[#allocation4 + $0x18] sm:$0xff]
    %v107 = vld [vmem:[#allocation4 + $0x20] sm:$0xff]
    %v108 = vld [vmem:[#allocation4 + $0x28] sm:$0xff]
    %v109 = vld [vmem:[#allocation4 + $0x30] sm:$0xff]
    %v110 = vld [vmem:[#allocation4 + $0x38] sm:$0xff]
    %v111 = vld [vmem:[#allocation4 + $0x40] sm:$0xff]
    %v112 = vld [vmem:[#allocation4 + $0x48] sm:$0xff]
    %v113 = vld [vmem:[#allocation4 + $0x50] sm:$0xff]
    %v114 = vld [vmem:[#allocation4 + $0x58] sm:$0xff]
    %v115 = vld [vmem:[#allocation4 + $0x60] sm:$0xff]
    %v116 = vld [vmem:[#allocation4 + $0x68] sm:$0xff]
    %v117 = vld [vmem:[#allocation4 + $0x70] sm:$0xff]
    %v118 = vld [vmem:[#allocation4 + $0x78] sm:$0xff]
    %v119 = vld [vmem:[#allocation4 + $0x80] sm:$0xff]
    %v120 = vld [vmem:[#allocation4 + $0x88] sm:$0xff]
    %v121 = vld [vmem:[#allocation4 + $0x90] sm:$0xff]
    %v122 = vld [vmem:[#allocation4 + $0x98] sm:$0xff]
    %v123 = vld [vmem:[#allocation4 + $0xa0] sm:$0xff]
    %v124 = vld [vmem:[#allocation4 + $0xa8] sm:$0xff]
    %v125 = vld [vmem:[#allocation4 + $0xb0] sm:$0xff]
    %v126 = vld [vmem:[#allocation4 + $0xb8] sm:$0xff]
    %v127 = vld [vmem:[#allocation4 + $0xc0] sm:$0xff]
    %v128 = vld [vmem:[#allocation4 + $0xc8] sm:$0xff]
    %v129 = vld [vmem:[#allocation4 + $0xd0] sm:$0xff]
    %v130 = vld [vmem:[#allocation4 + $0xd8] sm:$0xff]
    %v131 = vld [vmem:[#allocation4 + $0xe0] sm:$0xff]
    %v132 = vld [vmem:[#allocation4 + $0xe8] sm:$0xff]
    %v133 = vld [vmem:[#allocation4 + $0xf0] sm:$0xff]
    %v134 = vld [vmem:[#allocation4 + $0xf8] sm:$0xff]
    %v135 = vld [vmem:[#allocation4 + $0x100] sm:$0xff]
    %v136 = vld [vmem:[#allocation4 + $0x108] sm:$0xff]
    %v137 = vld [vmem:[%s2] sm:$0xf]
    %v139 = vlaneseq
    %v140 = vshrl.u32 %v139, 7
    %v141 = vsub.s32 0, %v140
    %v142 = vrot.slane %v137, %v141
    %v143 = vlaneseq
    %v144 = vshrl.u32 %v143, 7
    %v145 = vsub.s32 1, %v144
    %v146 = vrot.slane %v137, %v145
    %v147 = vlaneseq
    %v148 = vshrl.u32 %v147, 7
    %v149 = vsub.s32 2, %v148
    %v150 = vrot.slane %v137, %v149
    %v151 = vlaneseq
    %v152 = vshrl.u32 %v151, 7
    %v153 = vsub.s32 3, %v152
    %v154 = vrot.slane %v137, %v153
    %v193 = vunpack.c.l.b16 %v103
    %v194 = vunpack.c.h.b16 %v103
    %v195 = vunpack.c.l.b16 %v104
    %v196 = vunpack.c.h.b16 %v104
    %v197 = vunpack.c.l.b16 %v105
    %v198 = vunpack.c.h.b16 %v105
    %v199 = vunpack.c.l.b16 %v106
    %v200 = vunpack.c.h.b16 %v106
    %v201 = vunpack.c.l.b16 %v107
    %v202 = vunpack.c.h.b16 %v107
    %v203 = vunpack.c.l.b16 %v108
    %v204 = vunpack.c.h.b16 %v108
    %v205 = vunpack.c.l.b16 %v109
    %v206 = vunpack.c.h.b16 %v109
    %v207 = vunpack.c.l.b16 %v110
    %v208 = vunpack.c.h.b16 %v110
    %v209 = vunpack.c.l.b16 %v111
    %v210 = vunpack.c.h.b16 %v111
    %v211 = vunpack.c.l.b16 %v112
    %v212 = vunpack.c.h.b16 %v112
    %v213 = vunpack.c.l.b16 %v113
    %v214 = vunpack.c.h.b16 %v113
    %v215 = vunpack.c.l.b16 %v114
    %v216 = vunpack.c.h.b16 %v114
    %v217 = vunpack.c.l.b16 %v115
    %v218 = vunpack.c.h.b16 %v115
    %v219 = vunpack.c.l.b16 %v116
    %v220 = vunpack.c.h.b16 %v116
    %v221 = vunpack.c.l.b16 %v117
    %v222 = vunpack.c.h.b16 %v117
    %v223 = vunpack.c.l.b16 %v118
    %v224 = vunpack.c.h.b16 %v118
    %v225 = vunpack.c.l.b16 %v119
    %v226 = vunpack.c.h.b16 %v119
    %v227 = vunpack.c.l.b16 %v120
    %v228 = vunpack.c.h.b16 %v120
    %v229 = vunpack.c.l.b16 %v121
    %v230 = vunpack.c.h.b16 %v121
    %v231 = vunpack.c.l.b16 %v122
    %v232 = vunpack.c.h.b16 %v122
    %v233 = vunpack.c.l.b16 %v123
    %v234 = vunpack.c.h.b16 %v123
    %v235 = vunpack.c.l.b16 %v124
    %v236 = vunpack.c.h.b16 %v124
    %v237 = vunpack.c.l.b16 %v125
    %v238 = vunpack.c.h.b16 %v125
    %v239 = vunpack.c.l.b16 %v126
    %v240 = vunpack.c.h.b16 %v126
    %v241 = vunpack.c.l.b16 %v127
    %v242 = vunpack.c.h.b16 %v127
    %v243 = vunpack.c.l.b16 %v128
    %v244 = vunpack.c.h.b16 %v128
    %v245 = vunpack.c.l.b16 %v129
    %v246 = vunpack.c.h.b16 %v129
    %v247 = vunpack.c.l.b16 %v130
    %v248 = vunpack.c.h.b16 %v130
    %v249 = vunpack.c.l.b16 %v131
    %v250 = vunpack.c.h.b16 %v131
    %v251 = vunpack.c.l.b16 %v132
    %v252 = vunpack.c.h.b16 %v132
    %v253 = vunpack.c.l.b16 %v133
    %v254 = vunpack.c.h.b16 %v133
    %v255 = vunpack.c.l.b16 %v134
    %v256 = vunpack.c.h.b16 %v134
    %v257 = vunpack.c.l.b16 %v135
    %v258 = vunpack.c.h.b16 %v135
    %v259 = vunpack.c.l.b16 %v136
    %v260 = vunpack.c.h.b16 %v136
    %v261 = vpack.c.b16 %v197, %v193
    %v262 = vpack.c.b16 %v198, %v194
    %v263 = vpack.c.b16 %v199, %v195
    %v264 = vpack.c.b16 %v200, %v196
    %v265 = vpack.c.b16 %v205, %v201
    %v266 = vpack.c.b16 %v206, %v202
    %v267 = vpack.c.b16 %v207, %v203
    %v268 = vpack.c.b16 %v208, %v204
    %v269 = vpack.c.b16 %v213, %v209
    %v270 = vpack.c.b16 %v214, %v210
    %v271 = vpack.c.b16 %v215, %v211
    %v272 = vpack.c.b16 %v216, %v212
    %v273 = vpack.c.b16 %v221, %v217
    %v274 = vpack.c.b16 %v222, %v218
    %v275 = vpack.c.b16 %v223, %v219
    %v276 = vpack.c.b16 %v224, %v220
    %v277 = vpack.c.b16 %v229, %v225
    %v278 = vpack.c.b16 %v230, %v226
    %v279 = vpack.c.b16 %v231, %v227
    %v280 = vpack.c.b16 %v232, %v228
    %v281 = vpack.c.b16 %v237, %v233
    %v282 = vpack.c.b16 %v238, %v234
    %v283 = vpack.c.b16 %v239, %v235
    %v284 = vpack.c.b16 %v240, %v236
    %v285 = vpack.c.b16 %v245, %v241
    %v286 = vpack.c.b16 %v246, %v242
    %v287 = vpack.c.b16 %v247, %v243
    %v288 = vpack.c.b16 %v248, %v244
    %v289 = vpack.c.b16 %v253, %v249
    %v290 = vpack.c.b16 %v254, %v250
    %v291 = vpack.c.b16 %v255, %v251
    %v292 = vpack.c.b16 %v256, %v252
    %v293 = vpack.c.b16 %v257, %v257
    %v294 = vpack.c.b16 %v258, %v258
    %v295 = vpack.c.b16 %v259, %v259
    %v296 = vpack.c.b16 %v260, %v260
    %vm329 = vcmask 56320
    %v331 = vsel %vm329, %v102, 0
    %vm333 = vcmask 1042432
    %vm334 = vcmask 1043456
    %v335 = vsel %vm333, 4294967295, 65535
    %v336 = vsel %vm334, %v335, 0
    %v338 = vand.u32 %v293, %v336
    %v341 = vand.u32 %v294, %v336
    %v344 = vand.u32 %v295, %v336
    %v347 = vand.u32 %v296, %v336
    %349 = vmatprep.subr.bf16.mxu0 %v262
    %350 = vmatpush1.bf16.msra.mxu0 %v261
    %351 = vmatprep.subr.bf16.mxu0 %v266
    %352 = vmatpush1.bf16.msra.mxu0 %v265
    %353 = vmatprep.subr.bf16.mxu0 %v270
    %354 = vmatpush1.bf16.msra.mxu0 %v269
    %355 = vmatprep.subr.bf16.mxu0 %v274
    %356 = vmatpush1.bf16.msra.mxu0 %v273
    %357 = vmatprep.subr.bf16.mxu0 %v278
    %358 = vmatpush1.bf16.msra.mxu0 %v277
    %359 = vmatprep.subr.bf16.mxu0 %v282
    %360 = vmatpush1.bf16.msra.mxu0 %v281
    %361 = vmatprep.subr.bf16.mxu0 %v286
    %362 = vmatpush1.bf16.msra.mxu0 %v285
    %363 = vmatprep.subr.bf16.mxu0 %v290
    %364 = vmatpush1.bf16.msra.mxu0 %v289
    %365 = vmatprep.subr.bf16.mxu0 %v341
    %366 = vmatpush1.bf16.msra.mxu0 %v338
    %367 = vmatprep.subr.bf16.mxu0 0
    %368 = vmatpush1.bf16.msra.mxu0 0
    %369 = vmatprep.subr.bf16.mxu0 0
    %370 = vmatpush1.bf16.msra.mxu0 0
    %371 = vmatprep.subr.bf16.mxu0 0
    %372 = vmatpush1.bf16.msra.mxu0 0
    %373 = vmatprep.subr.bf16.mxu0 0
    %374 = vmatpush1.bf16.msra.mxu0 0
    %375 = vmatprep.subr.bf16.mxu0 0
    %376 = vmatpush1.bf16.msra.mxu0 0
    %377 = vmatprep.subr.bf16.mxu0 0
    %378 = vmatpush1.bf16.msra.mxu0 0
    %379 = vmatprep.subr.bf16.mxu0 0
    %380 = vmatpush1.bf16.msra.mxu0 0
    %381 = vmatprep.mubr.bf16.mxu0 %v331
    %382 = vmatmul.mubr.bf16.gmra.mrb[0].mxu0 %v101
    %v383 = vpop.f32.mrb[0].mxu0
    %v384 = vadd.f32 %v142, %v383
    %v385 = vpop.f32.mrb[0].mxu0
    %v386 = vadd.f32 %v146, %v385
    %v387 = vpop.f32.mrb[0].mxu0
    %v388 = vpop.f32.mrb[0].mxu0
    %389 = vdwg.mxu0
    %390 = vmatprep.subr.bf16.mxu0 %v264
    %391 = vmatpush1.bf16.msra.mxu0 %v263
    %392 = vmatprep.subr.bf16.mxu0 %v268
    %393 = vmatpush1.bf16.msra.mxu0 %v267
    %394 = vmatprep.subr.bf16.mxu0 %v272
    %395 = vmatpush1.bf16.msra.mxu0 %v271
    %396 = vmatprep.subr.bf16.mxu0 %v276
    %397 = vmatpush1.bf16.msra.mxu0 %v275
    %398 = vmatprep.subr.bf16.mxu0 %v280
    %399 = vmatpush1.bf16.msra.mxu0 %v279
    %400 = vmatprep.subr.bf16.mxu0 %v284
    %401 = vmatpush1.bf16.msra.mxu0 %v283
    %402 = vmatprep.subr.bf16.mxu0 %v288
    %403 = vmatpush1.bf16.msra.mxu0 %v287
    %404 = vmatprep.subr.bf16.mxu0 %v292
    %405 = vmatpush1.bf16.msra.mxu0 %v291
    %406 = vmatprep.subr.bf16.mxu0 %v347
    %407 = vmatpush1.bf16.msra.mxu0 %v344
    %408 = vmatprep.subr.bf16.mxu0 0
    %409 = vmatpush1.bf16.msra.mxu0 0
    %410 = vmatprep.subr.bf16.mxu0 0
    %411 = vmatpush1.bf16.msra.mxu0 0
    %412 = vmatprep.subr.bf16.mxu0 0
    %413 = vmatpush1.bf16.msra.mxu0 0
    %414 = vmatprep.subr.bf16.mxu0 0
    %415 = vmatpush1.bf16.msra.mxu0 0
    %416 = vmatprep.subr.bf16.mxu0 0
    %417 = vmatpush1.bf16.msra.mxu0 0
    %418 = vmatprep.subr.bf16.mxu0 0
    %419 = vmatpush1.bf16.msra.mxu0 0
    %420 = vmatprep.subr.bf16.mxu0 0
    %421 = vmatpush1.bf16.msra.mxu0 0
    %422 = vmatprep.mubr.bf16.mxu0 %v331
    %423 = vmatmul.mubr.bf16.gmra.mrb[0].mxu0 %v101
    %v424 = vpop.f32.mrb[0].mxu0
    %v425 = vadd.f32 %v150, %v424
    %v426 = vpop.f32.mrb[0].mxu0
    %v427 = vadd.f32 %v154, %v426
    %v428 = vpop.f32.mrb[0].mxu0
    %v429 = vpop.f32.mrb[0].mxu0
    %430 = vdwg.mxu0
    %v431 = vmax.f32 %v384, 0.0
    %v432 = vmax.f32 %v386, 0.0
    %v433 = vmax.f32 %v425, 0.0
    %v434 = vmax.f32 %v427, 0.0
    %v435 = vpack.c.bf16 %v431, %v431
    %v436 = vpack.c.bf16 %v432, %v432
    %v437 = vpack.c.bf16 %v433, %v433
    %v438 = vpack.c.bf16 %v434, %v434
    %v439 = vld [vmem:[#allocation6] sm:$0xff]
    %v440 = vld [vmem:[#allocation6 + $0x8] sm:$0xff]
    %v441 = vld [vmem:[#allocation6 + $0x10] sm:$0xff]
    %v442 = vld [vmem:[#allocation6 + $0x18] sm:$0xff]
    %v443 = vld [vmem:[#allocation6 + $0x20] sm:$0xff]
    %v444 = vld [vmem:[#allocation6 + $0x28] sm:$0xff]
    %v445 = vld [vmem:[#allocation6 + $0x30] sm:$0xff]
    %v446 = vld [vmem:[#allocation6 + $0x38] sm:$0xff]
    %v447 = vld [vmem:[#allocation6 + $0x40] sm:$0xff]
    %v448 = vld [vmem:[#allocation6 + $0x48] sm:$0xff]
    %v449 = vld [vmem:[#allocation6 + $0x50] sm:$0xff]
    %v450 = vld [vmem:[#allocation6 + $0x58] sm:$0xff]
    %v451 = vld [vmem:[#allocation6 + $0x60] sm:$0xff]
    %v452 = vld [vmem:[#allocation6 + $0x68] sm:$0xff]
    %v453 = vld [vmem:[#allocation6 + $0x70] sm:$0xff]
    %v454 = vld [vmem:[#allocation6 + $0x78] sm:$0xff]
    %v455 = vld [vmem:[#allocation6 + $0x80] sm:$0xff]
    %v456 = vld [vmem:[#allocation6 + $0x88] sm:$0xff]
    %v457 = vld [vmem:[#allocation6 + $0x90] sm:$0xff]
    %v458 = vld [vmem:[#allocation6 + $0x98] sm:$0xff]
    %v459 = vld [vmem:[#allocation6 + $0xa0] sm:$0xff]
    %v460 = vld [vmem:[#allocation6 + $0xa8] sm:$0xff]
    %v461 = vld [vmem:[#allocation6 + $0xb0] sm:$0xff]
    %v462 = vld [vmem:[#allocation6 + $0xb8] sm:$0xff]
    %v463 = vld [vmem:[#allocation6 + $0xc0] sm:$0xff]
    %v464 = vld [vmem:[#allocation6 + $0xc8] sm:$0xff]
    %v465 = vld [vmem:[#allocation6 + $0xd0] sm:$0xff]
    %v466 = vld [vmem:[#allocation6 + $0xd8] sm:$0xff]
    %v467 = vld [vmem:[#allocation6 + $0xe0] sm:$0xff]
    %v468 = vld [vmem:[#allocation6 + $0xe8] sm:$0xff]
    %v469 = vld [vmem:[#allocation6 + $0xf0] sm:$0xff]
    %v470 = vld [vmem:[#allocation6 + $0xf8] sm:$0xff]
    %v471 = vld [vmem:[#allocation6 + $0x100] sm:$0xff]
    %v472 = vld [vmem:[#allocation6 + $0x108] sm:$0xff]
    %v473 = vld [vmem:[#allocation6 + $0x110] sm:$0xff]
    %v474 = vld [vmem:[#allocation6 + $0x118] sm:$0xff]
    %v475 = vld [vmem:[#allocation6 + $0x120] sm:$0xff]
    %v476 = vld [vmem:[#allocation6 + $0x128] sm:$0xff]
    %v477 = vld [vmem:[#allocation6 + $0x130] sm:$0xff]
    %v478 = vld [vmem:[#allocation6 + $0x138] sm:$0xff]
    %v479 = vld [vmem:[#allocation6 + $0x140] sm:$0xff]
    %v480 = vld [vmem:[#allocation6 + $0x148] sm:$0xff]
    %v481 = vld [vmem:[#allocation6 + $0x150] sm:$0xff]
    %v482 = vld [vmem:[#allocation6 + $0x158] sm:$0xff]
    %v483 = vld [vmem:[#allocation6 + $0x160] sm:$0xff]
    %v484 = vld [vmem:[#allocation6 + $0x168] sm:$0xff]
    %v485 = vld [vmem:[#allocation6 + $0x170] sm:$0xff]
    %v486 = vld [vmem:[#allocation6 + $0x178] sm:$0xff]
    %v487 = vld [vmem:[#allocation6 + $0x180] sm:$0xff]
    %v488 = vld [vmem:[#allocation6 + $0x188] sm:$0xff]
    %v489 = vld [vmem:[#allocation6 + $0x190] sm:$0xff]
    %v490 = vld [vmem:[#allocation6 + $0x198] sm:$0xff]
    %v491 = vld [vmem:[#allocation6 + $0x1a0] sm:$0xff]
    %v492 = vld [vmem:[#allocation6 + $0x1a8] sm:$0xff]
    %v493 = vld [vmem:[#allocation6 + $0x1b0] sm:$0xff]
    %v494 = vld [vmem:[#allocation6 + $0x1b8] sm:$0xff]
    %v495 = vld [vmem:[#allocation6 + $0x1c0] sm:$0xff]
    %v496 = vld [vmem:[#allocation6 + $0x1c8] sm:$0xff]
    %v497 = vld [vmem:[#allocation6 + $0x1d0] sm:$0xff]
    %v498 = vld [vmem:[#allocation6 + $0x1d8] sm:$0xff]
    %v499 = vld [vmem:[#allocation6 + $0x1e0] sm:$0xff]
    %v500 = vld [vmem:[#allocation6 + $0x1e8] sm:$0xff]
    %v501 = vld [vmem:[#allocation6 + $0x1f0] sm:$0xff]
    %v502 = vld [vmem:[#allocation6 + $0x1f8] sm:$0xff]
    %v503 = vld [vmem:[#allocation6 + $0x200] sm:$0xff]
    %v504 = vld [vmem:[#allocation6 + $0x208] sm:$0xff]
    %v505 = vld [vmem:[#allocation6 + $0x210] sm:$0xff]
    %v506 = vld [vmem:[#allocation6 + $0x218] sm:$0xff]
    %v507 = vld [vmem:[#allocation6 + $0x220] sm:$0xff]
    %v508 = vld [vmem:[#allocation6 + $0x228] sm:$0xff]
    %v509 = vld [vmem:[#allocation6 + $0x230] sm:$0xff]
    %v510 = vld [vmem:[#allocation6 + $0x238] sm:$0xff]
    %v511 = vld [vmem:[#allocation6 + $0x240] sm:$0xff]
    %v512 = vld [vmem:[#allocation6 + $0x248] sm:$0xff]
    %v513 = vld [vmem:[#allocation6 + $0x250] sm:$0xff]
    %v514 = vld [vmem:[#allocation6 + $0x258] sm:$0xff]
    %v515 = vld [vmem:[#allocation6 + $0x260] sm:$0xff]
    %v516 = vld [vmem:[#allocation6 + $0x268] sm:$0xff]
    %v517 = vld [vmem:[#allocation6 + $0x270] sm:$0xff]
    %v518 = vld [vmem:[#allocation6 + $0x278] sm:$0xff]
    %v519 = vld [vmem:[#allocation6 + $0x280] sm:$0xff]
    %v520 = vld [vmem:[#allocation6 + $0x288] sm:$0xff]
    %v521 = vld [vmem:[#allocation6 + $0x290] sm:$0xff]
    %v522 = vld [vmem:[#allocation6 + $0x298] sm:$0xff]
    %v523 = vld [vmem:[#allocation6 + $0x2a0] sm:$0xff]
    %v524 = vld [vmem:[#allocation6 + $0x2a8] sm:$0xff]
    %v525 = vld [vmem:[#allocation6 + $0x2b0] sm:$0xff]
    %v526 = vld [vmem:[#allocation6 + $0x2b8] sm:$0xff]
    %v527 = vld [vmem:[#allocation6 + $0x2c0] sm:$0xff]
    %v528 = vld [vmem:[#allocation6 + $0x2c8] sm:$0xff]
    %v529 = vld [vmem:[#allocation6 + $0x2d0] sm:$0xff]
    %v530 = vld [vmem:[#allocation6 + $0x2d8] sm:$0xff]
    %v531 = vld [vmem:[#allocation6 + $0x2e0] sm:$0xff]
    %v532 = vld [vmem:[#allocation6 + $0x2e8] sm:$0xff]
    %v533 = vld [vmem:[#allocation6 + $0x2f0] sm:$0xff]
    %v534 = vld [vmem:[#allocation6 + $0x2f8] sm:$0xff]
    %v535 = vld [vmem:[#allocation6 + $0x300] sm:$0xff]
    %v536 = vld [vmem:[#allocation6 + $0x308] sm:$0xff]
    %v537 = vld [vmem:[#allocation6 + $0x310] sm:$0xff]
    %v538 = vld [vmem:[#allocation6 + $0x318] sm:$0xff]
    %v539 = vld [vmem:[#allocation6 + $0x320] sm:$0xff]
    %v540 = vld [vmem:[#allocation6 + $0x328] sm:$0xff]
    %v541 = vld [vmem:[#allocation6 + $0x330] sm:$0xff]
    %v542 = vld [vmem:[#allocation6 + $0x338] sm:$0xff]
    %v543 = vld [vmem:[#allocation6 + $0x340] sm:$0xff]
    %v544 = vld [vmem:[#allocation6 + $0x348] sm:$0xff]
    %v545 = vld [vmem:[#allocation6 + $0x350] sm:$0xff]
    %v546 = vld [vmem:[#allocation6 + $0x358] sm:$0xff]
    %v547 = vld [vmem:[#allocation6 + $0x360] sm:$0xff]
    %v548 = vld [vmem:[#allocation6 + $0x368] sm:$0xff]
    %v549 = vld [vmem:[#allocation6 + $0x370] sm:$0xff]
    %v550 = vld [vmem:[#allocation6 + $0x378] sm:$0xff]
    %v551 = vld [vmem:[#allocation6 + $0x380] sm:$0xff]
    %v552 = vld [vmem:[#allocation6 + $0x388] sm:$0xff]
    %v553 = vld [vmem:[#allocation6 + $0x390] sm:$0xff]
    %v554 = vld [vmem:[#allocation6 + $0x398] sm:$0xff]
    %v555 = vld [vmem:[#allocation6 + $0x3a0] sm:$0xff]
    %v556 = vld [vmem:[#allocation6 + $0x3a8] sm:$0xff]
    %v557 = vld [vmem:[#allocation6 + $0x3b0] sm:$0xff]
    %v558 = vld [vmem:[#allocation6 + $0x3b8] sm:$0xff]
    %v559 = vld [vmem:[#allocation6 + $0x3c0] sm:$0xff]
    %v560 = vld [vmem:[#allocation6 + $0x3c8] sm:$0xff]
    %v561 = vld [vmem:[#allocation6 + $0x3d0] sm:$0xff]
    %v562 = vld [vmem:[#allocation6 + $0x3d8] sm:$0xff]
    %v563 = vld [vmem:[#allocation6 + $0x3e0] sm:$0xff]
    %v564 = vld [vmem:[#allocation6 + $0x3e8] sm:$0xff]
    %v565 = vld [vmem:[#allocation6 + $0x3f0] sm:$0xff]
    %v566 = vld [vmem:[#allocation6 + $0x3f8] sm:$0xff]
    %v567 = vld [vmem:[%s4] sm:$0xf]
    %v569 = vlaneseq
    %v570 = vshrl.u32 %v569, 7
    %v571 = vsub.s32 0, %v570
    %v572 = vrot.slane %v567, %v571
    %v573 = vlaneseq
    %v574 = vshrl.u32 %v573, 7
    %v575 = vsub.s32 1, %v574
    %v576 = vrot.slane %v567, %v575
    %v577 = vlaneseq
    %v578 = vshrl.u32 %v577, 7
    %v579 = vsub.s32 2, %v578
    %v580 = vrot.slane %v567, %v579
    %v581 = vlaneseq
    %v582 = vshrl.u32 %v581, 7
    %v583 = vsub.s32 3, %v582
    %v584 = vrot.slane %v567, %v583
    %v717 = vunpack.c.l.b16 %v439
    %v718 = vunpack.c.h.b16 %v439
    %v719 = vunpack.c.l.b16 %v440
    %v720 = vunpack.c.h.b16 %v440
    %v721 = vunpack.c.l.b16 %v441
    %v722 = vunpack.c.h.b16 %v441
    %v723 = vunpack.c.l.b16 %v442
    %v724 = vunpack.c.h.b16 %v442
    %v725 = vunpack.c.l.b16 %v443
    %v726 = vunpack.c.h.b16 %v443
    %v727 = vunpack.c.l.b16 %v444
    %v728 = vunpack.c.h.b16 %v444
    %v729 = vunpack.c.l.b16 %v445
    %v730 = vunpack.c.h.b16 %v445
    %v731 = vunpack.c.l.b16 %v446
    %v732 = vunpack.c.h.b16 %v446
    %v733 = vunpack.c.l.b16 %v447
    %v734 = vunpack.c.h.b16 %v447
    %v735 = vunpack.c.l.b16 %v448
    %v736 = vunpack.c.h.b16 %v448
    %v737 = vunpack.c.l.b16 %v449
    %v738 = vunpack.c.h.b16 %v449
    %v739 = vunpack.c.l.b16 %v450
    %v740 = vunpack.c.h.b16 %v450
    %v741 = vunpack.c.l.b16 %v451
    %v742 = vunpack.c.h.b16 %v451
    %v743 = vunpack.c.l.b16 %v452
    %v744 = vunpack.c.h.b16 %v452
    %v745 = vunpack.c.l.b16 %v453
    %v746 = vunpack.c.h.b16 %v453
    %v747 = vunpack.c.l.b16 %v454
    %v748 = vunpack.c.h.b16 %v454
    %v749 = vunpack.c.l.b16 %v455
    %v750 = vunpack.c.h.b16 %v455
    %v751 = vunpack.c.l.b16 %v456
    %v752 = vunpack.c.h.b16 %v456
    %v753 = vunpack.c.l.b16 %v457
    %v754 = vunpack.c.h.b16 %v457
    %v755 = vunpack.c.l.b16 %v458
    %v756 = vunpack.c.h.b16 %v458
    %v757 = vunpack.c.l.b16 %v459
    %v758 = vunpack.c.h.b16 %v459
    %v759 = vunpack.c.l.b16 %v460
    %v760 = vunpack.c.h.b16 %v460
    %v761 = vunpack.c.l.b16 %v461
    %v762 = vunpack.c.h.b16 %v461
    %v763 = vunpack.c.l.b16 %v462
    %v764 = vunpack.c.h.b16 %v462
    %v765 = vunpack.c.l.b16 %v463
    %v766 = vunpack.c.h.b16 %v463
    %v767 = vunpack.c.l.b16 %v464
    %v768 = vunpack.c.h.b16 %v464
    %v769 = vunpack.c.l.b16 %v465
    %v770 = vunpack.c.h.b16 %v465
    %v771 = vunpack.c.l.b16 %v466
    %v772 = vunpack.c.h.b16 %v466
    %v773 = vunpack.c.l.b16 %v467
    %v774 = vunpack.c.h.b16 %v467
    %v775 = vunpack.c.l.b16 %v468
    %v776 = vunpack.c.h.b16 %v468
    %v777 = vunpack.c.l.b16 %v469
    %v778 = vunpack.c.h.b16 %v469
    %v779 = vunpack.c.l.b16 %v470
    %v780 = vunpack.c.h.b16 %v470
    %v781 = vunpack.c.l.b16 %v471
    %v782 = vunpack.c.h.b16 %v471
    %v783 = vunpack.c.l.b16 %v472
    %v784 = vunpack.c.h.b16 %v472
    %v785 = vunpack.c.l.b16 %v473
    %v786 = vunpack.c.h.b16 %v473
    %v787 = vunpack.c.l.b16 %v474
    %v788 = vunpack.c.h.b16 %v474
    %v789 = vunpack.c.l.b16 %v475
    %v790 = vunpack.c.h.b16 %v475
    %v791 = vunpack.c.l.b16 %v476
    %v792 = vunpack.c.h.b16 %v476
    %v793 = vunpack.c.l.b16 %v477
    %v794 = vunpack.c.h.b16 %v477
    %v795 = vunpack.c.l.b16 %v478
    %v796 = vunpack.c.h.b16 %v478
    %v797 = vunpack.c.l.b16 %v479
    %v798 = vunpack.c.h.b16 %v479
    %v799 = vunpack.c.l.b16 %v480
    %v800 = vunpack.c.h.b16 %v480
    %v801 = vunpack.c.l.b16 %v481
    %v802 = vunpack.c.h.b16 %v481
    %v803 = vunpack.c.l.b16 %v482
    %v804 = vunpack.c.h.b16 %v482
    %v805 = vunpack.c.l.b16 %v483
    %v806 = vunpack.c.h.b16 %v483
    %v807 = vunpack.c.l.b16 %v484
    %v808 = vunpack.c.h.b16 %v484
    %v809 = vunpack.c.l.b16 %v485
    %v810 = vunpack.c.h.b16 %v485
    %v811 = vunpack.c.l.b16 %v486
    %v812 = vunpack.c.h.b16 %v486
    %v813 = vunpack.c.l.b16 %v487
    %v814 = vunpack.c.h.b16 %v487
    %v815 = vunpack.c.l.b16 %v488
    %v816 = vunpack.c.h.b16 %v488
    %v817 = vunpack.c.l.b16 %v489
    %v818 = vunpack.c.h.b16 %v489
    %v819 = vunpack.c.l.b16 %v490
    %v820 = vunpack.c.h.b16 %v490
    %v821 = vunpack.c.l.b16 %v491
    %v822 = vunpack.c.h.b16 %v491
    %v823 = vunpack.c.l.b16 %v492
    %v824 = vunpack.c.h.b16 %v492
    %v825 = vunpack.c.l.b16 %v493
    %v826 = vunpack.c.h.b16 %v493
    %v827 = vunpack.c.l.b16 %v494
    %v828 = vunpack.c.h.b16 %v494
    %v829 = vunpack.c.l.b16 %v495
    %v830 = vunpack.c.h.b16 %v495
    %v831 = vunpack.c.l.b16 %v496
    %v832 = vunpack.c.h.b16 %v496
    %v833 = vunpack.c.l.b16 %v497
    %v834 = vunpack.c.h.b16 %v497
    %v835 = vunpack.c.l.b16 %v498
    %v836 = vunpack.c.h.b16 %v498
    %v837 = vunpack.c.l.b16 %v499
    %v838 = vunpack.c.h.b16 %v499
    %v839 = vunpack.c.l.b16 %v500
    %v840 = vunpack.c.h.b16 %v500
    %v841 = vunpack.c.l.b16 %v501
    %v842 = vunpack.c.h.b16 %v501
    %v843 = vunpack.c.l.b16 %v502
    %v844 = vunpack.c.h.b16 %v502
    %v845 = vunpack.c.l.b16 %v503
    %v846 = vunpack.c.h.b16 %v503
    %v847 = vunpack.c.l.b16 %v504
    %v848 = vunpack.c.h.b16 %v504
    %v849 = vunpack.c.l.b16 %v505
    %v850 = vunpack.c.h.b16 %v505
    %v851 = vunpack.c.l.b16 %v506
    %v852 = vunpack.c.h.b16 %v506
    %v853 = vunpack.c.l.b16 %v507
    %v854 = vunpack.c.h.b16 %v507
    %v855 = vunpack.c.l.b16 %v508
    %v856 = vunpack.c.h.b16 %v508
    %v857 = vunpack.c.l.b16 %v509
    %v858 = vunpack.c.h.b16 %v509
    %v859 = vunpack.c.l.b16 %v510
    %v860 = vunpack.c.h.b16 %v510
    %v861 = vunpack.c.l.b16 %v511
    %v862 = vunpack.c.h.b16 %v511
    %v863 = vunpack.c.l.b16 %v512
    %v864 = vunpack.c.h.b16 %v512
    %v865 = vunpack.c.l.b16 %v513
    %v866 = vunpack.c.h.b16 %v513
    %v867 = vunpack.c.l.b16 %v514
    %v868 = vunpack.c.h.b16 %v514
    %v869 = vunpack.c.l.b16 %v515
    %v870 = vunpack.c.h.b16 %v515
    %v871 = vunpack.c.l.b16 %v516
    %v872 = vunpack.c.h.b16 %v516
    %v873 = vunpack.c.l.b16 %v517
    %v874 = vunpack.c.h.b16 %v517
    %v875 = vunpack.c.l.b16 %v518
    %v876 = vunpack.c.h.b16 %v518
    %v877 = vunpack.c.l.b16 %v519
    %v878 = vunpack.c.h.b16 %v519
    %v879 = vunpack.c.l.b16 %v520
    %v880 = vunpack.c.h.b16 %v520
    %v881 = vunpack.c.l.b16 %v521
    %v882 = vunpack.c.h.b16 %v521
    %v883 = vunpack.c.l.b16 %v522
    %v884 = vunpack.c.h.b16 %v522
    %v885 = vunpack.c.l.b16 %v523
    %v886 = vunpack.c.h.b16 %v523
    %v887 = vunpack.c.l.b16 %v524
    %v888 = vunpack.c.h.b16 %v524
    %v889 = vunpack.c.l.b16 %v525
    %v890 = vunpack.c.h.b16 %v525
    %v891 = vunpack.c.l.b16 %v526
    %v892 = vunpack.c.h.b16 %v526
    %v893 = vunpack.c.l.b16 %v527
    %v894 = vunpack.c.h.b16 %v527
    %v895 = vunpack.c.l.b16 %v528
    %v896 = vunpack.c.h.b16 %v528
    %v897 = vunpack.c.l.b16 %v529
    %v898 = vunpack.c.h.b16 %v529
    %v899 = vunpack.c.l.b16 %v530
    %v900 = vunpack.c.h.b16 %v530
    %v901 = vunpack.c.l.b16 %v531
    %v902 = vunpack.c.h.b16 %v531
    %v903 = vunpack.c.l.b16 %v532
    %v904 = vunpack.c.h.b16 %v532
    %v905 = vunpack.c.l.b16 %v533
    %v906 = vunpack.c.h.b16 %v533
    %v907 = vunpack.c.l.b16 %v534
    %v908 = vunpack.c.h.b16 %v534
    %v909 = vunpack.c.l.b16 %v535
    %v910 = vunpack.c.h.b16 %v535
    %v911 = vunpack.c.l.b16 %v536
    %v912 = vunpack.c.h.b16 %v536
    %v913 = vunpack.c.l.b16 %v537
    %v914 = vunpack.c.h.b16 %v537
    %v915 = vunpack.c.l.b16 %v538
    %v916 = vunpack.c.h.b16 %v538
    %v917 = vunpack.c.l.b16 %v539
    %v918 = vunpack.c.h.b16 %v539
    %v919 = vunpack.c.l.b16 %v540
    %v920 = vunpack.c.h.b16 %v540
    %v921 = vunpack.c.l.b16 %v541
    %v922 = vunpack.c.h.b16 %v541
    %v923 = vunpack.c.l.b16 %v542
    %v924 = vunpack.c.h.b16 %v542
    %v925 = vunpack.c.l.b16 %v543
    %v926 = vunpack.c.h.b16 %v543
    %v927 = vunpack.c.l.b16 %v544
    %v928 = vunpack.c.h.b16 %v544
    %v929 = vunpack.c.l.b16 %v545
    %v930 = vunpack.c.h.b16 %v545
    %v931 = vunpack.c.l.b16 %v546
    %v932 = vunpack.c.h.b16 %v546
    %v933 = vunpack.c.l.b16 %v547
    %v934 = vunpack.c.h.b16 %v547
    %v935 = vunpack.c.l.b16 %v548
    %v936 = vunpack.c.h.b16 %v548
    %v937 = vunpack.c.l.b16 %v549
    %v938 = vunpack.c.h.b16 %v549
    %v939 = vunpack.c.l.b16 %v550
    %v940 = vunpack.c.h.b16 %v550
    %v941 = vunpack.c.l.b16 %v551
    %v942 = vunpack.c.h.b16 %v551
    %v943 = vunpack.c.l.b16 %v552
    %v944 = vunpack.c.h.b16 %v552
    %v945 = vunpack.c.l.b16 %v553
    %v946 = vunpack.c.h.b16 %v553
    %v947 = vunpack.c.l.b16 %v554
    %v948 = vunpack.c.h.b16 %v554
    %v949 = vunpack.c.l.b16 %v555
    %v950 = vunpack.c.h.b16 %v555
    %v951 = vunpack.c.l.b16 %v556
    %v952 = vunpack.c.h.b16 %v556
    %v953 = vunpack.c.l.b16 %v557
    %v954 = vunpack.c.h.b16 %v557
    %v955 = vunpack.c.l.b16 %v558
    %v956 = vunpack.c.h.b16 %v558
    %v957 = vunpack.c.l.b16 %v559
    %v958 = vunpack.c.h.b16 %v559
    %v959 = vunpack.c.l.b16 %v560
    %v960 = vunpack.c.h.b16 %v560
    %v961 = vunpack.c.l.b16 %v561
    %v962 = vunpack.c.h.b16 %v561
    %v963 = vunpack.c.l.b16 %v562
    %v964 = vunpack.c.h.b16 %v562
    %v965 = vunpack.c.l.b16 %v563
    %v966 = vunpack.c.h.b16 %v563
    %v967 = vunpack.c.l.b16 %v564
    %v968 = vunpack.c.h.b16 %v564
    %v969 = vunpack.c.l.b16 %v565
    %v970 = vunpack.c.h.b16 %v565
    %v971 = vunpack.c.l.b16 %v566
    %v972 = vunpack.c.h.b16 %v566
    %v973 = vpack.c.b16 %v721, %v717
    %v974 = vpack.c.b16 %v722, %v718
    %v975 = vpack.c.b16 %v723, %v719
    %v976 = vpack.c.b16 %v724, %v720
    %v977 = vpack.c.b16 %v729, %v725
    %v978 = vpack.c.b16 %v730, %v726
    %v979 = vpack.c.b16 %v731, %v727
    %v980 = vpack.c.b16 %v732, %v728
    %v981 = vpack.c.b16 %v737, %v733
    %v982 = vpack.c.b16 %v738, %v734
    %v983 = vpack.c.b16 %v739, %v735
    %v984 = vpack.c.b16 %v740, %v736
    %v985 = vpack.c.b16 %v745, %v741
    %v986 = vpack.c.b16 %v746, %v742
    %v987 = vpack.c.b16 %v747, %v743
    %v988 = vpack.c.b16 %v748, %v744
    %v989 = vpack.c.b16 %v753, %v749
    %v990 = vpack.c.b16 %v754, %v750
    %v991 = vpack.c.b16 %v755, %v751
    %v992 = vpack.c.b16 %v756, %v752
    %v993 = vpack.c.b16 %v761, %v757
    %v994 = vpack.c.b16 %v762, %v758
    %v995 = vpack.c.b16 %v763, %v759
    %v996 = vpack.c.b16 %v764, %v760
    %v997 = vpack.c.b16 %v769, %v765
    %v998 = vpack.c.b16 %v770, %v766
    %v999 = vpack.c.b16 %v771, %v767
    %v1000 = vpack.c.b16 %v772, %v768
    %v1001 = vpack.c.b16 %v777, %v773
    %v1002 = vpack.c.b16 %v778, %v774
    %v1003 = vpack.c.b16 %v779, %v775
    %v1004 = vpack.c.b16 %v780, %v776
    %v1005 = vpack.c.b16 %v785, %v781
    %v1006 = vpack.c.b16 %v786, %v782
    %v1007 = vpack.c.b16 %v787, %v783
    %v1008 = vpack.c.b16 %v788, %v784
    %v1009 = vpack.c.b16 %v793, %v789
    %v1010 = vpack.c.b16 %v794, %v790
    %v1011 = vpack.c.b16 %v795, %v791
    %v1012 = vpack.c.b16 %v796, %v792
    %v1013 = vpack.c.b16 %v801, %v797
    %v1014 = vpack.c.b16 %v802, %v798
    %v1015 = vpack.c.b16 %v803, %v799
    %v1016 = vpack.c.b16 %v804, %v800
    %v1017 = vpack.c.b16 %v809, %v805
    %v1018 = vpack.c.b16 %v810, %v806
    %v1019 = vpack.c.b16 %v811, %v807
    %v1020 = vpack.c.b16 %v812, %v808
    %v1021 = vpack.c.b16 %v817, %v813
    %v1022 = vpack.c.b16 %v818, %v814
    %v1023 = vpack.c.b16 %v819, %v815
    %v1024 = vpack.c.b16 %v820, %v816
    %v1025 = vpack.c.b16 %v825, %v821
    %v1026 = vpack.c.b16 %v826, %v822
    %v1027 = vpack.c.b16 %v827, %v823
    %v1028 = vpack.c.b16 %v828, %v824
    %v1029 = vpack.c.b16 %v833, %v829
    %v1030 = vpack.c.b16 %v834, %v830
    %v1031 = vpack.c.b16 %v835, %v831
    %v1032 = vpack.c.b16 %v836, %v832
    %v1033 = vpack.c.b16 %v841, %v837
    %v1034 = vpack.c.b16 %v842, %v838
    %v1035 = vpack.c.b16 %v843, %v839
    %v1036 = vpack.c.b16 %v844, %v840
    %v1037 = vpack.c.b16 %v849, %v845
    %v1038 = vpack.c.b16 %v850, %v846
    %v1039 = vpack.c.b16 %v851, %v847
    %v1040 = vpack.c.b16 %v852, %v848
    %v1041 = vpack.c.b16 %v857, %v853
    %v1042 = vpack.c.b16 %v858, %v854
    %v1043 = vpack.c.b16 %v859, %v855
    %v1044 = vpack.c.b16 %v860, %v856
    %v1045 = vpack.c.b16 %v865, %v861
    %v1046 = vpack.c.b16 %v866, %v862
    %v1047 = vpack.c.b16 %v867, %v863
    %v1048 = vpack.c.b16 %v868, %v864
    %v1049 = vpack.c.b16 %v873, %v869
    %v1050 = vpack.c.b16 %v874, %v870
    %v1051 = vpack.c.b16 %v875, %v871
    %v1052 = vpack.c.b16 %v876, %v872
    %v1053 = vpack.c.b16 %v881, %v877
    %v1054 = vpack.c.b16 %v882, %v878
    %v1055 = vpack.c.b16 %v883, %v879
    %v1056 = vpack.c.b16 %v884, %v880
    %v1057 = vpack.c.b16 %v889, %v885
    %v1058 = vpack.c.b16 %v890, %v886
    %v1059 = vpack.c.b16 %v891, %v887
    %v1060 = vpack.c.b16 %v892, %v888
    %v1061 = vpack.c.b16 %v897, %v893
    %v1062 = vpack.c.b16 %v898, %v894
    %v1063 = vpack.c.b16 %v899, %v895
    %v1064 = vpack.c.b16 %v900, %v896
    %v1065 = vpack.c.b16 %v905, %v901
    %v1066 = vpack.c.b16 %v906, %v902
    %v1067 = vpack.c.b16 %v907, %v903
    %v1068 = vpack.c.b16 %v908, %v904
    %v1069 = vpack.c.b16 %v913, %v909
    %v1070 = vpack.c.b16 %v914, %v910
    %v1071 = vpack.c.b16 %v915, %v911
    %v1072 = vpack.c.b16 %v916, %v912
    %v1073 = vpack.c.b16 %v921, %v917
    %v1074 = vpack.c.b16 %v922, %v918
    %v1075 = vpack.c.b16 %v923, %v919
    %v1076 = vpack.c.b16 %v924, %v920
    %v1077 = vpack.c.b16 %v929, %v925
    %v1078 = vpack.c.b16 %v930, %v926
    %v1079 = vpack.c.b16 %v931, %v927
    %v1080 = vpack.c.b16 %v932, %v928
    %v1081 = vpack.c.b16 %v937, %v933
    %v1082 = vpack.c.b16 %v938, %v934
    %v1083 = vpack.c.b16 %v939, %v935
    %v1084 = vpack.c.b16 %v940, %v936
    %v1085 = vpack.c.b16 %v945, %v941
    %v1086 = vpack.c.b16 %v946, %v942
    %v1087 = vpack.c.b16 %v947, %v943
    %v1088 = vpack.c.b16 %v948, %v944
    %v1089 = vpack.c.b16 %v953, %v949
    %v1090 = vpack.c.b16 %v954, %v950
    %v1091 = vpack.c.b16 %v955, %v951
    %v1092 = vpack.c.b16 %v956, %v952
    %v1093 = vpack.c.b16 %v961, %v957
    %v1094 = vpack.c.b16 %v962, %v958
    %v1095 = vpack.c.b16 %v963, %v959
    %v1096 = vpack.c.b16 %v964, %v960
    %v1097 = vpack.c.b16 %v969, %v965
    %v1098 = vpack.c.b16 %v970, %v966
    %v1099 = vpack.c.b16 %v971, %v967
    %v1100 = vpack.c.b16 %v972, %v968
    %1229 = vmatprep.subr.bf16.mxu0 %v974
    %1230 = vmatpush1.bf16.msra.mxu0 %v973
    %1231 = vmatprep.subr.bf16.mxu0 %v978
    %1232 = vmatpush1.bf16.msra.mxu0 %v977
    %1233 = vmatprep.subr.bf16.mxu0 %v982
    %1234 = vmatpush1.bf16.msra.mxu0 %v981
    %1235 = vmatprep.subr.bf16.mxu0 %v986
    %1236 = vmatpush1.bf16.msra.mxu0 %v985
    %1237 = vmatprep.subr.bf16.mxu0 %v990
    %1238 = vmatpush1.bf16.msra.mxu0 %v989
    %1239 = vmatprep.subr.bf16.mxu0 %v994
    %1240 = vmatpush1.bf16.msra.mxu0 %v993
    %1241 = vmatprep.subr.bf16.mxu0 %v998
    %1242 = vmatpush1.bf16.msra.mxu0 %v997
    %1243 = vmatprep.subr.bf16.mxu0 %v1002
    %1244 = vmatpush1.bf16.msra.mxu0 %v1001
    %1245 = vmatprep.subr.bf16.mxu0 %v1006
    %1246 = vmatpush1.bf16.msra.mxu0 %v1005
    %1247 = vmatprep.subr.bf16.mxu0 %v1010
    %1248 = vmatpush1.bf16.msra.mxu0 %v1009
    %1249 = vmatprep.subr.bf16.mxu0 %v1014
    %1250 = vmatpush1.bf16.msra.mxu0 %v1013
    %1251 = vmatprep.subr.bf16.mxu0 %v1018
    %1252 = vmatpush1.bf16.msra.mxu0 %v1017
    %1253 = vmatprep.subr.bf16.mxu0 %v1022
    %1254 = vmatpush1.bf16.msra.mxu0 %v1021
    %1255 = vmatprep.subr.bf16.mxu0 %v1026
    %1256 = vmatpush1.bf16.msra.mxu0 %v1025
    %1257 = vmatprep.subr.bf16.mxu0 %v1030
    %1258 = vmatpush1.bf16.msra.mxu0 %v1029
    %1259 = vmatprep.subr.bf16.mxu0 %v1034
    %1260 = vmatpush1.bf16.msra.mxu0 %v1033
    %1261 = vmatprep.mubr.bf16.mxu0 %v436
    %1262 = vmatmul.mubr.bf16.gmra.mrb[0].mxu0 %v435
    %v1263 = vpop.f32.mrb[0].mxu0
    %v1264 = vadd.f32 %v572, %v1263
    %v1265 = vpop.f32.mrb[0].mxu0
    %v1266 = vadd.f32 %v576, %v1265
    %v1267 = vpop.f32.mrb[0].mxu0
    %v1268 = vpop.f32.mrb[0].mxu0
    %1269 = vdwg.mxu0
    %1270 = vmatprep.subr.bf16.mxu0 %v1038
    %1271 = vmatpush1.bf16.msra.mxu0 %v1037
    %1272 = vmatprep.subr.bf16.mxu0 %v1042
    %1273 = vmatpush1.bf16.msra.mxu0 %v1041
    %1274 = vmatprep.subr.bf16.mxu0 %v1046
    %1275 = vmatpush1.bf16.msra.mxu0 %v1045
    %1276 = vmatprep.subr.bf16.mxu0 %v1050
    %1277 = vmatpush1.bf16.msra.mxu0 %v1049
    %1278 = vmatprep.subr.bf16.mxu0 %v1054
    %1279 = vmatpush1.bf16.msra.mxu0 %v1053
    %1280 = vmatprep.subr.bf16.mxu0 %v1058
    %1281 = vmatpush1.bf16.msra.mxu0 %v1057
    %1282 = vmatprep.subr.bf16.mxu0 %v1062
    %1283 = vmatpush1.bf16.msra.mxu0 %v1061
    %1284 = vmatprep.subr.bf16.mxu0 %v1066
    %1285 = vmatpush1.bf16.msra.mxu0 %v1065
    %1286 = vmatprep.subr.bf16.mxu0 %v1070
    %1287 = vmatpush1.bf16.msra.mxu0 %v1069
    %1288 = vmatprep.subr.bf16.mxu0 %v1074
    %1289 = vmatpush1.bf16.msra.mxu0 %v1073
    %1290 = vmatprep.subr.bf16.mxu0 %v1078
    %1291 = vmatpush1.bf16.msra.mxu0 %v1077
    %1292 = vmatprep.subr.bf16.mxu0 %v1082
    %1293 = vmatpush1.bf16.msra.mxu0 %v1081
    %1294 = vmatprep.subr.bf16.mxu0 %v1086
    %1295 = vmatpush1.bf16.msra.mxu0 %v1085
    %1296 = vmatprep.subr.bf16.mxu0 %v1090
    %1297 = vmatpush1.bf16.msra.mxu0 %v1089
    %1298 = vmatprep.subr.bf16.mxu0 %v1094
    %1299 = vmatpush1.bf16.msra.mxu0 %v1093
    %1300 = vmatprep.subr.bf16.mxu0 %v1098
    %1301 = vmatpush1.bf16.msra.mxu0 %v1097
    %1302 = vmatprep.mubr.bf16.mxu0 %v438
    %1303 = vmatmul.mubr.bf16.gmra.mrb[0].mxu0 %v437
    %v1304 = vpop.f32.mrb[0].mxu0
    %v1305 = vadd.f32 %v1264, %v1304
    %v1306 = vpop.f32.mrb[0].mxu0
    %v1307 = vadd.f32 %v1266, %v1306
    %v1308 = vpop.f32.mrb[0].mxu0
    %v1309 = vpop.f32.mrb[0].mxu0
    %1310 = vdwg.mxu0
    %1311 = vmatprep.subr.bf16.mxu0 %v976
    %1312 = vmatpush1.bf16.msra.mxu0 %v975
    %1313 = vmatprep.subr.bf16.mxu0 %v980
    %1314 = vmatpush1.bf16.msra.mxu0 %v979
    %1315 = vmatprep.subr.bf16.mxu0 %v984
    %1316 = vmatpush1.bf16.msra.mxu0 %v983
    %1317 = vmatprep.subr.bf16.mxu0 %v988
    %1318 = vmatpush1.bf16.msra.mxu0 %v987
    %1319 = vmatprep.subr.bf16.mxu0 %v992
    %1320 = vmatpush1.bf16.msra.mxu0 %v991
    %1321 = vmatprep.subr.bf16.mxu0 %v996
    %1322 = vmatpush1.bf16.msra.mxu0 %v995
    %1323 = vmatprep.subr.bf16.mxu0 %v1000
    %1324 = vmatpush1.bf16.msra.mxu0 %v999
    %1325 = vmatprep.subr.bf16.mxu0 %v1004
    %1326 = vmatpush1.bf16.msra.mxu0 %v1003
    %1327 = vmatprep.subr.bf16.mxu0 %v1008
    %1328 = vmatpush1.bf16.msra.mxu0 %v1007
    %1329 = vmatprep.subr.bf16.mxu0 %v1012
    %1330 = vmatpush1.bf16.msra.mxu0 %v1011
    %1331 = vmatprep.subr.bf16.mxu0 %v1016
    %1332 = vmatpush1.bf16.msra.mxu0 %v1015
    %1333 = vmatprep.subr.bf16.mxu0 %v1020
    %1334 = vmatpush1.bf16.msra.mxu0 %v1019
    %1335 = vmatprep.subr.bf16.mxu0 %v1024
    %1336 = vmatpush1.bf16.msra.mxu0 %v1023
    %1337 = vmatprep.subr.bf16.mxu0 %v1028
    %1338 = vmatpush1.bf16.msra.mxu0 %v1027
    %1339 = vmatprep.subr.bf16.mxu0 %v1032
    %1340 = vmatpush1.bf16.msra.mxu0 %v1031
    %1341 = vmatprep.subr.bf16.mxu0 %v1036
    %1342 = vmatpush1.bf16.msra.mxu0 %v1035
    %1343 = vmatprep.mubr.bf16.mxu0 %v436
    %1344 = vmatmul.mubr.bf16.gmra.mrb[0].mxu0 %v435
    %v1345 = vpop.f32.mrb[0].mxu0
    %v1346 = vadd.f32 %v580, %v1345
    %v1347 = vpop.f32.mrb[0].mxu0
    %v1348 = vadd.f32 %v584, %v1347
    %v1349 = vpop.f32.mrb[0].mxu0
    %v1350 = vpop.f32.mrb[0].mxu0
    %1351 = vdwg.mxu0
    %1352 = vmatprep.subr.bf16.mxu0 %v1040
    %1353 = vmatpush1.bf16.msra.mxu0 %v1039
    %1354 = vmatprep.subr.bf16.mxu0 %v1044
    %1355 = vmatpush1.bf16.msra.mxu0 %v1043
    %1356 = vmatprep.subr.bf16.mxu0 %v1048
    %1357 = vmatpush1.bf16.msra.mxu0 %v1047
    %1358 = vmatprep.subr.bf16.mxu0 %v1052
    %1359 = vmatpush1.bf16.msra.mxu0 %v1051
    %1360 = vmatprep.subr.bf16.mxu0 %v1056
    %1361 = vmatpush1.bf16.msra.mxu0 %v1055
    %1362 = vmatprep.subr.bf16.mxu0 %v1060
    %1363 = vmatpush1.bf16.msra.mxu0 %v1059
    %1364 = vmatprep.subr.bf16.mxu0 %v1064
    %1365 = vmatpush1.bf16.msra.mxu0 %v1063
    %1366 = vmatprep.subr.bf16.mxu0 %v1068
    %1367 = vmatpush1.bf16.msra.mxu0 %v1067
    %1368 = vmatprep.subr.bf16.mxu0 %v1072
    %1369 = vmatpush1.bf16.msra.mxu0 %v1071
    %1370 = vmatprep.subr.bf16.mxu0 %v1076
    %1371 = vmatpush1.bf16.msra.mxu0 %v1075
    %1372 = vmatprep.subr.bf16.mxu0 %v1080
    %1373 = vmatpush1.bf16.msra.mxu0 %v1079
    %1374 = vmatprep.subr.bf16.mxu0 %v1084
    %1375 = vmatpush1.bf16.msra.mxu0 %v1083
    %1376 = vmatprep.subr.bf16.mxu0 %v1088
    %1377 = vmatpush1.bf16.msra.mxu0 %v1087
    %1378 = vmatprep.subr.bf16.mxu0 %v1092
    %1379 = vmatpush1.bf16.msra.mxu0 %v1091
    %1380 = vmatprep.subr.bf16.mxu0 %v1096
    %1381 = vmatpush1.bf16.msra.mxu0 %v1095
    %1382 = vmatprep.subr.bf16.mxu0 %v1100
    %1383 = vmatpush1.bf16.msra.mxu0 %v1099
    %1384 = vmatprep.mubr.bf16.mxu0 %v438
    %1385 = vmatmul.mubr.bf16.gmra.mrb[0].mxu0 %v437
    %v1386 = vpop.f32.mrb[0].mxu0
    %v1387 = vadd.f32 %v1346, %v1386
    %v1388 = vpop.f32.mrb[0].mxu0
    %v1389 = vadd.f32 %v1348, %v1388
    %v1390 = vpop.f32.mrb[0].mxu0
    %v1391 = vpop.f32.mrb[0].mxu0
    %1392 = vdwg.mxu0
    %v1393 = vmax.f32 %v1305, 0.0
    %v1394 = vmax.f32 %v1307, 0.0
    %v1395 = vmax.f32 %v1387, 0.0
    %v1396 = vmax.f32 %v1389, 0.0
    %v1397 = vpack.c.bf16 %v1393, %v1393
    %v1398 = vpack.c.bf16 %v1394, %v1394
    %v1399 = vpack.c.bf16 %v1395, %v1395
    %v1400 = vpack.c.bf16 %v1396, %v1396
    %v1401 = vld [vmem:[#allocation7] sm:$0xf]
    %v1402 = vld [vmem:[#allocation7 + $0x4] sm:$0xf]
    %v1403 = vld [vmem:[#allocation7 + $0x8] sm:$0xf]
    %v1404 = vld [vmem:[#allocation7 + $0xc] sm:$0xf]
    %v1405 = vld [vmem:[#allocation7 + $0x10] sm:$0xf]
    %v1406 = vld [vmem:[#allocation7 + $0x14] sm:$0xf]
    %v1407 = vld [vmem:[#allocation7 + $0x18] sm:$0xf]
    %v1408 = vld [vmem:[#allocation7 + $0x1c] sm:$0xf]
    %v1409 = vld [vmem:[#allocation7 + $0x20] sm:$0xf]
    %v1410 = vld [vmem:[#allocation7 + $0x24] sm:$0xf]
    %v1411 = vld [vmem:[#allocation7 + $0x28] sm:$0xf]
    %v1412 = vld [vmem:[#allocation7 + $0x2c] sm:$0xf]
    %v1413 = vld [vmem:[#allocation7 + $0x30] sm:$0xf]
    %v1414 = vld [vmem:[#allocation7 + $0x34] sm:$0xf]
    %v1415 = vld [vmem:[#allocation7 + $0x38] sm:$0xf]
    %v1416 = vld [vmem:[#allocation7 + $0x3c] sm:$0xf]
    %v1417 = vld [vmem:[#allocation7 + $0x40] sm:$0xf]
    %v1418 = vld [vmem:[#allocation7 + $0x44] sm:$0xf]
    %v1419 = vld [vmem:[#allocation7 + $0x48] sm:$0xf]
    %v1420 = vld [vmem:[#allocation7 + $0x4c] sm:$0xf]
    %v1421 = vld [vmem:[#allocation7 + $0x50] sm:$0xf]
    %v1422 = vld [vmem:[#allocation7 + $0x54] sm:$0xf]
    %v1423 = vld [vmem:[#allocation7 + $0x58] sm:$0xf]
    %v1424 = vld [vmem:[#allocation7 + $0x5c] sm:$0xf]
    %v1425 = vld [vmem:[#allocation7 + $0x60] sm:$0xf]
    %v1426 = vld [vmem:[#allocation7 + $0x64] sm:$0xf]
    %v1427 = vld [vmem:[#allocation7 + $0x68] sm:$0xf]
    %v1428 = vld [vmem:[#allocation7 + $0x6c] sm:$0xf]
    %v1429 = vld [vmem:[#allocation7 + $0x70] sm:$0xf]
    %v1430 = vld [vmem:[#allocation7 + $0x74] sm:$0xf]
    %v1431 = vld [vmem:[#allocation7 + $0x78] sm:$0xf]
    %v1432 = vld [vmem:[#allocation7 + $0x7c] sm:$0xf]
    %v1433 = vld [vmem:[#allocation7 + $0x80] sm:$0xf]
    %v1434 = vld [vmem:[#allocation7 + $0x84] sm:$0xf]
    %v1435 = vld [vmem:[#allocation7 + $0x88] sm:$0xf]
    %v1436 = vld [vmem:[#allocation7 + $0x8c] sm:$0xf]
    %v1437 = vld [vmem:[#allocation7 + $0x90] sm:$0xf]
    %v1438 = vld [vmem:[#allocation7 + $0x94] sm:$0xf]
    %v1439 = vld [vmem:[#allocation7 + $0x98] sm:$0xf]
    %v1440 = vld [vmem:[#allocation7 + $0x9c] sm:$0xf]
    %v1441 = vld [vmem:[#allocation7 + $0xa0] sm:$0xf]
    %v1442 = vld [vmem:[#allocation7 + $0xa4] sm:$0xf]
    %v1443 = vld [vmem:[#allocation7 + $0xa8] sm:$0xf]
    %v1444 = vld [vmem:[#allocation7 + $0xac] sm:$0xf]
    %v1445 = vld [vmem:[#allocation7 + $0xb0] sm:$0xf]
    %v1446 = vld [vmem:[#allocation7 + $0xb4] sm:$0xf]
    %v1447 = vld [vmem:[#allocation7 + $0xb8] sm:$0xf]
    %v1448 = vld [vmem:[#allocation7 + $0xbc] sm:$0xf]
    %v1449 = vld [vmem:[#allocation7 + $0xc0] sm:$0xf]
    %v1450 = vld [vmem:[#allocation7 + $0xc4] sm:$0xf]
    %v1451 = vld [vmem:[#allocation7 + $0xc8] sm:$0xf]
    %v1452 = vld [vmem:[#allocation7 + $0xcc] sm:$0xf]
    %v1453 = vld [vmem:[#allocation7 + $0xd0] sm:$0xf]
    %v1454 = vld [vmem:[#allocation7 + $0xd4] sm:$0xf]
    %v1455 = vld [vmem:[#allocation7 + $0xd8] sm:$0xf]
    %v1456 = vld [vmem:[#allocation7 + $0xdc] sm:$0xf]
    %v1457 = vld [vmem:[#allocation7 + $0xe0] sm:$0xf]
    %v1458 = vld [vmem:[#allocation7 + $0xe4] sm:$0xf]
    %v1459 = vld [vmem:[#allocation7 + $0xe8] sm:$0xf]
    %v1460 = vld [vmem:[#allocation7 + $0xec] sm:$0xf]
    %v1461 = vld [vmem:[#allocation7 + $0xf0] sm:$0xf]
    %v1462 = vld [vmem:[#allocation7 + $0xf4] sm:$0xf]
    %v1463 = vld [vmem:[#allocation7 + $0xf8] sm:$0xf]
    %v1464 = vld [vmem:[#allocation7 + $0xfc] sm:$0xf]
    %v1465 = vld [vmem:[%s6] sm:$0x1]
    %v1467 = vlaneseq
    %v1468 = vshrl.u32 %v1467, 7
    %v1469 = vsub.s32 0, %v1468
    %v1470 = vrot.slane %v1465, %v1469
    %v1536 = vunpack.c.l.b16 %v1401
    %v1537 = vunpack.c.l.b16 %v1402
    %v1538 = vunpack.c.l.b16 %v1403
    %v1539 = vunpack.c.l.b16 %v1404
    %v1540 = vunpack.c.l.b16 %v1405
    %v1541 = vunpack.c.l.b16 %v1406
    %v1542 = vunpack.c.l.b16 %v1407
    %v1543 = vunpack.c.l.b16 %v1408
    %v1544 = vunpack.c.l.b16 %v1409
    %v1545 = vunpack.c.l.b16 %v1410
    %v1546 = vunpack.c.l.b16 %v1411
    %v1547 = vunpack.c.l.b16 %v1412
    %v1548 = vunpack.c.l.b16 %v1413
    %v1549 = vunpack.c.l.b16 %v1414
    %v1550 = vunpack.c.l.b16 %v1415
    %v1551 = vunpack.c.l.b16 %v1416
    %v1552 = vunpack.c.l.b16 %v1417
    %v1553 = vunpack.c.l.b16 %v1418
    %v1554 = vunpack.c.l.b16 %v1419
    %v1555 = vunpack.c.l.b16 %v1420
    %v1556 = vunpack.c.l.b16 %v1421
    %v1557 = vunpack.c.l.b16 %v1422
    %v1558 = vunpack.c.l.b16 %v1423
    %v1559 = vunpack.c.l.b16 %v1424
    %v1560 = vunpack.c.l.b16 %v1425
    %v1561 = vunpack.c.l.b16 %v1426
    %v1562 = vunpack.c.l.b16 %v1427
    %v1563 = vunpack.c.l.b16 %v1428
    %v1564 = vunpack.c.l.b16 %v1429
    %v1565 = vunpack.c.l.b16 %v1430
    %v1566 = vunpack.c.l.b16 %v1431
    %v1567 = vunpack.c.l.b16 %v1432
    %v1568 = vunpack.c.l.b16 %v1433
    %v1569 = vunpack.c.l.b16 %v1434
    %v1570 = vunpack.c.l.b16 %v1435
    %v1571 = vunpack.c.l.b16 %v1436
    %v1572 = vunpack.c.l.b16 %v1437
    %v1573 = vunpack.c.l.b16 %v1438
    %v1574 = vunpack.c.l.b16 %v1439
    %v1575 = vunpack.c.l.b16 %v1440
    %v1576 = vunpack.c.l.b16 %v1441
    %v1577 = vunpack.c.l.b16 %v1442
    %v1578 = vunpack.c.l.b16 %v1443
    %v1579 = vunpack.c.l.b16 %v1444
    %v1580 = vunpack.c.l.b16 %v1445
    %v1581 = vunpack.c.l.b16 %v1446
    %v1582 = vunpack.c.l.b16 %v1447
    %v1583 = vunpack.c.l.b16 %v1448
    %v1584 = vunpack.c.l.b16 %v1449
    %v1585 = vunpack.c.l.b16 %v1450
    %v1586 = vunpack.c.l.b16 %v1451
    %v1587 = vunpack.c.l.b16 %v1452
    %v1588 = vunpack.c.l.b16 %v1453
    %v1589 = vunpack.c.l.b16 %v1454
    %v1590 = vunpack.c.l.b16 %v1455
    %v1591 = vunpack.c.l.b16 %v1456
    %v1592 = vunpack.c.l.b16 %v1457
    %v1593 = vunpack.c.l.b16 %v1458
    %v1594 = vunpack.c.l.b16 %v1459
    %v1595 = vunpack.c.l.b16 %v1460
    %v1596 = vunpack.c.l.b16 %v1461
    %v1597 = vunpack.c.l.b16 %v1462
    %v1598 = vunpack.c.l.b16 %v1463
    %v1599 = vunpack.c.l.b16 %v1464
    %v1600 = vpack.c.b16 %v1537, %v1536
    %v1601 = vpack.c.b16 %v1539, %v1538
    %v1602 = vpack.c.b16 %v1541, %v1540
    %v1603 = vpack.c.b16 %v1543, %v1542
    %v1604 = vpack.c.b16 %v1545, %v1544
    %v1605 = vpack.c.b16 %v1547, %v1546
    %v1606 = vpack.c.b16 %v1549, %v1548
    %v1607 = vpack.c.b16 %v1551, %v1550
    %v1608 = vpack.c.b16 %v1553, %v1552
    %v1609 = vpack.c.b16 %v1555, %v1554
    %v1610 = vpack.c.b16 %v1557, %v1556
    %v1611 = vpack.c.b16 %v1559, %v1558
    %v1612 = vpack.c.b16 %v1561, %v1560
    %v1613 = vpack.c.b16 %v1563, %v1562
    %v1614 = vpack.c.b16 %v1565, %v1564
    %v1615 = vpack.c.b16 %v1567, %v1566
    %v1616 = vpack.c.b16 %v1569, %v1568
    %v1617 = vpack.c.b16 %v1571, %v1570
    %v1618 = vpack.c.b16 %v1573, %v1572
    %v1619 = vpack.c.b16 %v1575, %v1574
    %v1620 = vpack.c.b16 %v1577, %v1576
    %v1621 = vpack.c.b16 %v1579, %v1578
    %v1622 = vpack.c.b16 %v1581, %v1580
    %v1623 = vpack.c.b16 %v1583, %v1582
    %v1624 = vpack.c.b16 %v1585, %v1584
    %v1625 = vpack.c.b16 %v1587, %v1586
    %v1626 = vpack.c.b16 %v1589, %v1588
    %v1627 = vpack.c.b16 %v1591, %v1590
    %v1628 = vpack.c.b16 %v1593, %v1592
    %v1629 = vpack.c.b16 %v1595, %v1594
    %v1630 = vpack.c.b16 %v1597, %v1596
    %v1631 = vpack.c.b16 %v1599, %v1598
    %1664 = vmatprep.subr.bf16.mxu0 0
    %1665 = vmatpush1.bf16.msra.mxu0 %v1600
    %1666 = vmatprep.subr.bf16.mxu0 0
    %1667 = vmatpush1.bf16.msra.mxu0 %v1601
    %1668 = vmatprep.subr.bf16.mxu0 0
    %1669 = vmatpush1.bf16.msra.mxu0 %v1602
    %1670 = vmatprep.subr.bf16.mxu0 0
    %1671 = vmatpush1.bf16.msra.mxu0 %v1603
    %1672 = vmatprep.subr.bf16.mxu0 0
    %1673 = vmatpush1.bf16.msra.mxu0 %v1604
    %1674 = vmatprep.subr.bf16.mxu0 0
    %1675 = vmatpush1.bf16.msra.mxu0 %v1605
    %1676 = vmatprep.subr.bf16.mxu0 0
    %1677 = vmatpush1.bf16.msra.mxu0 %v1606
    %1678 = vmatprep.subr.bf16.mxu0 0
    %1679 = vmatpush1.bf16.msra.mxu0 %v1607
    %1680 = vmatprep.subr.bf16.mxu0 0
    %1681 = vmatpush1.bf16.msra.mxu0 %v1608
    %1682 = vmatprep.subr.bf16.mxu0 0
    %1683 = vmatpush1.bf16.msra.mxu0 %v1609
    %1684 = vmatprep.subr.bf16.mxu0 0
    %1685 = vmatpush1.bf16.msra.mxu0 %v1610
    %1686 = vmatprep.subr.bf16.mxu0 0
    %1687 = vmatpush1.bf16.msra.mxu0 %v1611
    %1688 = vmatprep.subr.bf16.mxu0 0
    %1689 = vmatpush1.bf16.msra.mxu0 %v1612
    %1690 = vmatprep.subr.bf16.mxu0 0
    %1691 = vmatpush1.bf16.msra.mxu0 %v1613
    %1692 = vmatprep.subr.bf16.mxu0 0
    %1693 = vmatpush1.bf16.msra.mxu0 %v1614
    %1694 = vmatprep.subr.bf16.mxu0 0
    %1695 = vmatpush1.bf16.msra.mxu0 %v1615
    %1696 = vmatprep.mubr.bf16.mxu0 %v1398
    %1697 = vmatmul.mubr.bf16.gmra.mrb[0].mxu0 %v1397
    %v1698 = vpop.f32.mrb[0].mxu0
    %v1699 = vadd.f32 %v1470, %v1698
    %v1700 = vpop.f32.mrb[0].mxu0
    %v1701 = vpop.f32.mrb[0].mxu0
    %v1702 = vpop.f32.mrb[0].mxu0
    %1703 = vdwg.mxu0
    %1704 = vmatprep.subr.bf16.mxu0 0
    %1705 = vmatpush1.bf16.msra.mxu0 %v1616
    %1706 = vmatprep.subr.bf16.mxu0 0
    %1707 = vmatpush1.bf16.msra.mxu0 %v1617
    %1708 = vmatprep.subr.bf16.mxu0 0
    %1709 = vmatpush1.bf16.msra.mxu0 %v1618
    %1710 = vmatprep.subr.bf16.mxu0 0
    %1711 = vmatpush1.bf16.msra.mxu0 %v1619
    %1712 = vmatprep.subr.bf16.mxu0 0
    %1713 = vmatpush1.bf16.msra.mxu0 %v1620
    %1714 = vmatprep.subr.bf16.mxu0 0
    %1715 = vmatpush1.bf16.msra.mxu0 %v1621
    %1716 = vmatprep.subr.bf16.mxu0 0
    %1717 = vmatpush1.bf16.msra.mxu0 %v1622
    %1718 = vmatprep.subr.bf16.mxu0 0
    %1719 = vmatpush1.bf16.msra.mxu0 %v1623
    %1720 = vmatprep.subr.bf16.mxu0 0
    %1721 = vmatpush1.bf16.msra.mxu0 %v1624
    %1722 = vmatprep.subr.bf16.mxu0 0
    %1723 = vmatpush1.bf16.msra.mxu0 %v1625
    %1724 = vmatprep.subr.bf16.mxu0 0
    %1725 = vmatpush1.bf16.msra.mxu0 %v1626
    %1726 = vmatprep.subr.bf16.mxu0 0
    %1727 = vmatpush1.bf16.msra.mxu0 %v1627
    %1728 = vmatprep.subr.bf16.mxu0 0
    %1729 = vmatpush1.bf16.msra.mxu0 %v1628
    %1730 = vmatprep.subr.bf16.mxu0 0
    %1731 = vmatpush1.bf16.msra.mxu0 %v1629
    %1732 = vmatprep.subr.bf16.mxu0 0
    %1733 = vmatpush1.bf16.msra.mxu0 %v1630
    %1734 = vmatprep.subr.bf16.mxu0 0
    %1735 = vmatpush1.bf16.msra.mxu0 %v1631
    %1736 = vmatprep.mubr.bf16.mxu0 %v1400
    %1737 = vmatmul.mubr.bf16.gmra.mrb[0].mxu0 %v1399
    %v1738 = vpop.f32.mrb[0].mxu0
    %v1739 = vadd.f32 %v1699, %v1738
    %v1740 = vpop.f32.mrb[0].mxu0
    %v1741 = vpop.f32.mrb[0].mxu0
    %v1742 = vpop.f32.mrb[0].mxu0
    %1743 = vdwg.mxu0
    %v1744 = vmul.f32 %v1739, %v1739
    %v1745 = vpack.c.bf16 %v1744, %v1744
    %v1746 = vld [vmem:[#allocation9] sm:$0xf]
    %v1747 = vld [vmem:[#allocation9 + $0x4] sm:$0xf]
    %v1748 = vld [vmem:[#allocation9 + $0x8] sm:$0xf]
    %v1749 = vld [vmem:[#allocation9 + $0xc] sm:$0xf]
    %v1750 = vld [vmem:[#allocation9 + $0x10] sm:$0xf]
    %v1751 = vld [vmem:[#allocation9 + $0x14] sm:$0xf]
    %v1752 = vld [vmem:[#allocation9 + $0x18] sm:$0xf]
    %v1753 = vld [vmem:[#allocation9 + $0x1c] sm:$0xf]
    %v1754 = vld [vmem:[#allocation9 + $0x20] sm:$0xf]
    %v1755 = vld [vmem:[#allocation9 + $0x24] sm:$0xf]
    %v1756 = vld [vmem:[#allocation9 + $0x28] sm:$0xf]
    %v1757 = vld [vmem:[#allocation9 + $0x2c] sm:$0xf]
    %v1758 = vld [vmem:[#allocation9 + $0x30] sm:$0xf]
    %v1759 = vld [vmem:[#allocation9 + $0x34] sm:$0xf]
    %v1760 = vld [vmem:[#allocation9 + $0x38] sm:$0xf]
    %v1761 = vld [vmem:[#allocation9 + $0x3c] sm:$0xf]
    %v1762 = vld [vmem:[%s8] sm:$0x1]
    %v1764 = vlaneseq
    %v1765 = vshrl.u32 %v1764, 7
    %v1766 = vsub.s32 0, %v1765
    %v1767 = vrot.slane %v1762, %v1766
    %v1785 = vunpack.c.l.b16 %v1746
    %v1786 = vunpack.c.l.b16 %v1747
    %v1787 = vunpack.c.l.b16 %v1748
    %v1788 = vunpack.c.l.b16 %v1749
    %v1789 = vunpack.c.l.b16 %v1750
    %v1790 = vunpack.c.l.b16 %v1751
    %v1791 = vunpack.c.l.b16 %v1752
    %v1792 = vunpack.c.l.b16 %v1753
    %v1793 = vunpack.c.l.b16 %v1754
    %v1794 = vunpack.c.l.b16 %v1755
    %v1795 = vunpack.c.l.b16 %v1756
    %v1796 = vunpack.c.l.b16 %v1757
    %v1797 = vunpack.c.l.b16 %v1758
    %v1798 = vunpack.c.l.b16 %v1759
    %v1799 = vunpack.c.l.b16 %v1760
    %v1800 = vunpack.c.l.b16 %v1761
    %v1801 = vpack.c.b16 %v1786, %v1785
    %v1802 = vpack.c.b16 %v1788, %v1787
    %v1803 = vpack.c.b16 %v1790, %v1789
    %v1804 = vpack.c.b16 %v1792, %v1791
    %v1805 = vpack.c.b16 %v1794, %v1793
    %v1806 = vpack.c.b16 %v1796, %v1795
    %v1807 = vpack.c.b16 %v1798, %v1797
    %v1808 = vpack.c.b16 %v1800, %v1799
    %1817 = vmatprep.subr.bf16.mxu0 0
    %1818 = vmatpush1.bf16.msra.mxu0 %v1801
    %1819 = vmatprep.subr.bf16.mxu0 0
    %1820 = vmatpush1.bf16.msra.mxu0 %v1802
    %1821 = vmatprep.subr.bf16.mxu0 0
    %1822 = vmatpush1.bf16.msra.mxu0 %v1803
    %1823 = vmatprep.subr.bf16.mxu0 0
    %1824 = vmatpush1.bf16.msra.mxu0 %v1804
    %1825 = vmatprep.subr.bf16.mxu0 0
    %1826 = vmatpush1.bf16.msra.mxu0 %v1805
    %1827 = vmatprep.subr.bf16.mxu0 0
    %1828 = vmatpush1.bf16.msra.mxu0 %v1806
    %1829 = vmatprep.subr.bf16.mxu0 0
    %1830 = vmatpush1.bf16.msra.mxu0 %v1807
    %1831 = vmatprep.subr.bf16.mxu0 0
    %1832 = vmatpush1.bf16.msra.mxu0 %v1808
    %1833 = vmatprep.subr.bf16.mxu0 0
    %1834 = vmatpush1.bf16.msra.mxu0 0
    %1835 = vmatprep.subr.bf16.mxu0 0
    %1836 = vmatpush1.bf16.msra.mxu0 0
    %1837 = vmatprep.subr.bf16.mxu0 0
    %1838 = vmatpush1.bf16.msra.mxu0 0
    %1839 = vmatprep.subr.bf16.mxu0 0
    %1840 = vmatpush1.bf16.msra.mxu0 0
    %1841 = vmatprep.subr.bf16.mxu0 0
    %1842 = vmatpush1.bf16.msra.mxu0 0
    %1843 = vmatprep.subr.bf16.mxu0 0
    %1844 = vmatpush1.bf16.msra.mxu0 0
    %1845 = vmatprep.subr.bf16.mxu0 0
    %1846 = vmatpush1.bf16.msra.mxu0 0
    %1847 = vmatprep.subr.bf16.mxu0 0
    %1848 = vmatpush1.bf16.msra.mxu0 0
    %1849 = vmatprep.mubr.bf16.mxu0 0
    %1850 = vmatmul.mubr.bf16.gmra.mrb[0].mxu0 %v1745
    %v1851 = vpop.f32.mrb[0].mxu0
    %v1852 = vadd.f32 %v1767, %v1851
    %v1853 = vpop.f32.mrb[0].mxu0
    %v1854 = vpop.f32.mrb[0].mxu0
    %v1855 = vpop.f32.mrb[0].mxu0
    %1856 = vdwg.mxu0
    %v1857 = vmax.f32 %v1852, 1e-24
    %v1858 = vrsqrt.pop %v1857
    %v1859 = vmul.f32 %v1739, %v1858
    %1860 = vst [vmem:[%s9] sm:$0xff] %v1859
    // Predicated region
    $region58: #{retarget_forward.1} parent=1 // pred_check
      _
    $region59: #{retarget_forward.1} parent=1 // pred_check_branch
      %1862 = sbr.rel (0) target = $region61
    $region60: #{retarget_forward.1} parent=1 // pred_region
      _
    $region61: #{retarget_forward.1} parent=1 // pred_fallthru
      _
    // Predicated region
    $region62: #{retarget_forward.1} parent=1 // pred_check
      _
    $region63: #{retarget_forward.1} parent=1 // pred_check_branch
      %1864 = sbr.rel (0) target = $region65
    $region64: #{retarget_forward.1} parent=1 // pred_region
      _
    $region65: #{retarget_forward.1} parent=1 // pred_fallthru
      _
    %1865 = vsyncpa [#allocation3], 1
    %1866 = vsyncpa [#allocation5], 1
    %1867 = vsyncpa [#allocation8], 1

</llo_original>
